<compile_context>
chip_gen: v5e
topology: v5e:2x2
jax: 0.10.0
libtpu: 0.0.40
codegen_flags: <defaults>
</compile_context>

<pallas_src>
import functools
import math

import jax
import jax.numpy as jnp
from jax import lax
from jax.experimental import pallas as pl
from jax.experimental.pallas import tpu as pltpu


# ----------------------------------------------------------------------------
# In-kernel helpers (traced inside the Pallas kernel body)
# ----------------------------------------------------------------------------
def _attention_acc(Q, K, V, w_out_t, num_heads):
    """Per-head scaled-dot-product attention with the head outputs folded
    directly into the out-projection accumulator (no concat).

    Q: (T, D) f32, K/V: (S, D) f32, w_out_t: (D, D) f32 (already W_out.T).
    Returns (T, D) f32 (out-projection applied, bias NOT added).
    """
    T, D = Q.shape
    hd = D // num_heads
    # Fold the softmax scale into Q once (instead of once per head).
    Q = Q * jnp.float32(1.0 / math.sqrt(hd))
    contract_last = (((1,), (1,)), ((), ()))
    out = jnp.zeros((T, D), jnp.float32)
    for h in range(num_heads):
        lo, hi = h * hd, (h + 1) * hd
        Qh = Q[:, lo:hi]                      # (T, hd)
        Kh = K[:, lo:hi]                      # (S, hd)
        Vh = V[:, lo:hi]                      # (S, hd)
        s = lax.dot_general(Qh, Kh, contract_last,
                            preferred_element_type=jnp.float32)   # (T, S)
        s = s - jnp.max(s, axis=-1, keepdims=True)
        p = jnp.exp(s)
        p = p * pl.reciprocal(jnp.sum(p, axis=-1, keepdims=True), approx=True)
        ctx = jnp.dot(p, Vh, preferred_element_type=jnp.float32)  # (T, hd)
        # Fold this head straight into the out-projection accumulator.
        out = out + jnp.dot(ctx, w_out_t[lo:hi, :],
                            preferred_element_type=jnp.float32)
    return out


def _add_layernorm(x, y, g, b, eps):
    """LayerNorm(x + y) over the last dim (f32 math)."""
    z = x + y
    mean = jnp.mean(z, axis=-1, keepdims=True)
    zc = z - mean
    var = jnp.mean(zc * zc, axis=-1, keepdims=True)
    return zc * lax.rsqrt(var + eps) * g + b


# ----------------------------------------------------------------------------
# Fused decoder-layer kernel (one batch element per grid step)
# ----------------------------------------------------------------------------
def _decoder_layer_kernel(tgt_ref, mem_ref, qpos_ref, pos_ref,
                          cwin_ref, cbin_ref, cwout_ref, cbout_ref,
                          swin_ref, sbin_ref, swout_ref, sbout_ref,
                          w1_ref, b1_ref, w2_ref, b2_ref,
                          n2g_ref, n2b_ref, n3g_ref, n3b_ref, n4g_ref, n4b_ref,
                          o_ref, *, num_heads, eps):
    f32 = jnp.float32
    tgt = tgt_ref[...].astype(f32)     # (T, D)
    mem = mem_ref[...].astype(f32)     # (S, D)
    qpos = qpos_ref[...].astype(f32)   # (T, D)
    pos = pos_ref[...].astype(f32)     # (S, D)
    D = tgt.shape[-1]

    # ---- cross attention: q = tgt + query_pos, k = memory + pos, v = memory
    cwin = cwin_ref[...].astype(f32)   # (D, 3D)  == W_in.T
    cbin = cbin_ref[0].astype(f32)     # (3D,)
    q_in = tgt + qpos
    k_in = mem + pos
    Q = jnp.dot(q_in, cwin[:, 0:D], preferred_element_type=f32) + cbin[0:D]
    K = jnp.dot(k_in, cwin[:, D:2 * D], preferred_element_type=f32) + cbin[D:2 * D]
    V = jnp.dot(mem, cwin[:, 2 * D:3 * D], preferred_element_type=f32) + cbin[2 * D:3 * D]
    attn = _attention_acc(Q, K, V, cwout_ref[...].astype(f32), num_heads)
    attn = attn + cbout_ref[0].astype(f32)
    x = _add_layernorm(tgt, attn,
                       n2g_ref[0].astype(f32), n2b_ref[0].astype(f32), eps)

    # ---- self attention: q = k = x + query_pos, v = x  (wide [Q|K] matmul)
    swin = swin_ref[...].astype(f32)   # (D, 3D)
    sbin = sbin_ref[0].astype(f32)
    qk_in = x + qpos
    QK = jnp.dot(qk_in, swin[:, 0:2 * D], preferred_element_type=f32) + sbin[0:2 * D]
    Q = QK[:, 0:D]
    K = QK[:, D:2 * D]
    V = jnp.dot(x, swin[:, 2 * D:3 * D], preferred_element_type=f32) + sbin[2 * D:3 * D]
    attn = _attention_acc(Q, K, V, swout_ref[...].astype(f32), num_heads)
    attn = attn + sbout_ref[0].astype(f32)
    x = _add_layernorm(x, attn,
                       n3g_ref[0].astype(f32), n3b_ref[0].astype(f32), eps)

    # ---- feed-forward: linear2(relu(linear1(x)))
    h = jnp.dot(x, w1_ref[...].astype(f32), preferred_element_type=f32)
    h = jnp.maximum(h + b1_ref[0].astype(f32), 0.0)
    y = jnp.dot(h, w2_ref[...].astype(f32), preferred_element_type=f32)
    y = y + b2_ref[0].astype(f32)
    x = _add_layernorm(x, y,
                       n4g_ref[0].astype(f32), n4b_ref[0].astype(f32), eps)

    o_ref[...] = x.astype(o_ref.dtype)


# ----------------------------------------------------------------------------
# Wrapper: TransformerDecoderLayer forward (forward_post semantics, eval mode)
# ----------------------------------------------------------------------------
def transformer_decoder_layer(params, tgt, memory, cam_mask=None,
                              pos=None, query_pos=None, nhead=4, eps=1e-5):
    """tgt: (T, B, D), memory: (S, B, D); pos/query_pos like memory/tgt.
    Returns (T, B, D)."""
    del cam_mask  # TODO(synk): cam_mask path not defined in provided source.
    T, B, D = tgt.shape
    S = memory.shape[0]
    Fdim = params['w1'].shape[0]

    to_bf = lambda t: jnp.transpose(t, (1, 0, 2))   # (L,B,D) -> (B,L,D), once
    tgt_b = to_bf(tgt)
    mem_b = to_bf(memory)
    qpos_b = to_bf(query_pos) if query_pos is not None else jnp.zeros_like(tgt_b)
    pos_b = to_bf(pos) if pos is not None else jnp.zeros_like(mem_b)

    # Pre-transpose weights once so every in-kernel matmul is (M,K)@(K,N).
    cwin_t = params['cross_w_in'].T      # (D, 3D)
    cwout_t = params['cross_w_out'].T    # (D, D)
    swin_t = params['self_w_in'].T       # (D, 3D)
    swout_t = params['self_w_out'].T     # (D, D)
    w1_t = params['w1'].T                # (D, F)
    w2_t = params['w2'].T                # (F, D)

    row2 = lambda v: v.reshape(1, -1)
    full2d = lambda shape: pl.BlockSpec(shape, lambda b: (0, 0))

    kernel = functools.partial(_decoder_layer_kernel, num_heads=nhead, eps=eps)

    # Advisory cost estimate (matmul flops + softmax transcendentals).
    flops = 2 * B * (T * D * D + 2 * S * D * D       # cross in-proj
                     + 2 * T * S * D + T * D * D     # cross attn + out-proj
                     + 3 * T * D * D                 # self in-proj
                     + 2 * T * T * D + T * D * D     # self attn + out-proj
                     + 2 * T * D * Fdim)             # FFN
    transcendentals = B * nhead * (T * S + T * T) + 3 * B * T
    bytes_accessed = 4 * (B * (3 * T * D + 2 * S * D)
                          + 2 * (3 * D * D + D * D + 4 * D)
                          + 2 * D * Fdim + Fdim + D + 6 * D)

    out_b = pl.pallas_call(
        kernel,
        out_shape=jax.ShapeDtypeStruct((B, T, D), tgt.dtype),
        grid=(B,),
        in_specs=[
            pl.BlockSpec((None, T, D), lambda b: (b, 0, 0)),   # tgt
            pl.BlockSpec((None, S, D), lambda b: (b, 0, 0)),   # memory
            pl.BlockSpec((None, T, D), lambda b: (b, 0, 0)),   # query_pos
            pl.BlockSpec((None, S, D), lambda b: (b, 0, 0)),   # pos
            full2d((D, 3 * D)), full2d((1, 3 * D)),            # cross in-proj
            full2d((D, D)), full2d((1, D)),                    # cross out-proj
            full2d((D, 3 * D)), full2d((1, 3 * D)),            # self in-proj
            full2d((D, D)), full2d((1, D)),                    # self out-proj
            full2d((D, Fdim)), full2d((1, Fdim)),              # linear1
            full2d((Fdim, D)), full2d((1, D)),                 # linear2
            full2d((1, D)), full2d((1, D)),                    # norm2
            full2d((1, D)), full2d((1, D)),                    # norm3
            full2d((1, D)), full2d((1, D)),                    # norm4
        ],
        out_specs=pl.BlockSpec((None, T, D), lambda b: (b, 0, 0)),
        compiler_params=pltpu.CompilerParams(
            dimension_semantics=("parallel",)),
        cost_estimate=pl.CostEstimate(flops=flops,
                                      transcendentals=transcendentals,
                                      bytes_accessed=bytes_accessed),
    )(tgt_b, mem_b, qpos_b, pos_b,
      cwin_t, row2(params['cross_b_in']), cwout_t, row2(params['cross_b_out']),
      swin_t, row2(params['self_b_in']), swout_t, row2(params['self_b_out']),
      w1_t, row2(params['b1']), w2_t, row2(params['b2']),
      row2(params['norm2_g']), row2(params['norm2_b']),
      row2(params['norm3_g']), row2(params['norm3_b']),
      row2(params['norm4_g']), row2(params['norm4_b']))

    return jnp.transpose(out_b, (1, 0, 2))  # back to (T, B, D)


# ----------------------------------------------------------------------------
# Pure-JAX reference (for correctness check)
# ----------------------------------------------------------------------------
def _ref_mha(q, k, v, w_in, b_in, w_out, b_out, H):
    D = q.shape[-1]
    hd = D // H
    Q = q @ w_in[:D].T + b_in[:D]
    K = k @ w_in[D:2 * D].T + b_in[D:2 * D]
    V = v @ w_in[2 * D:].T + b_in[2 * D:]
    B, T, _ = Q.shape
    S = K.shape[1]
    Qh = Q.reshape(B, T, H, hd).transpose(0, 2, 1, 3)
    Kh = K.reshape(B, S, H, hd).transpose(0, 2, 1, 3)
    Vh = V.reshape(B, S, H, hd).transpose(0, 2, 1, 3)
    sc = jnp.einsum('bhtd,bhsd->bhts', Qh, Kh) / math.sqrt(hd)
    p = jax.nn.softmax(sc, axis=-1)
    o = jnp.einsum('bhts,bhsd->bhtd', p, Vh).transpose(0, 2, 1, 3).reshape(B, T, D)
    return o @ w_out.T + b_out


def _ref_ln(x, g, b, eps=1e-5):
    m = jnp.mean(x, axis=-1, keepdims=True)
    v = jnp.mean((x - m) ** 2, axis=-1, keepdims=True)
    return (x - m) / jnp.sqrt(v + eps) * g + b


def _ref_layer(params, tgt, memory, pos, query_pos, nhead):
    to_bf = lambda t: jnp.transpose(t, (1, 0, 2))
    tgt_b = to_bf(tgt)
    q = to_bf(tgt + query_pos)
    k = to_bf(memory + pos)
    v = to_bf(memory)
    t2 = _ref_mha(q, k, v, params['cross_w_in'], params['cross_b_in'],
                  params['cross_w_out'], params['cross_b_out'], nhead)
    x = _ref_ln(tgt_b + t2, params['norm2_g'], params['norm2_b'])
    qs = x + to_bf(query_pos)
    t2 = _ref_mha(qs, qs, x, params['self_w_in'], params['self_b_in'],
                  params['self_w_out'], params['self_b_out'], nhead)
    x = _ref_ln(x + t2, params['norm3_g'], params['norm3_b'])
    h = jnp.maximum(x @ params['w1'].T + params['b1'], 0.0)
    t2 = h @ params['w2'].T + params['b2']
    x = _ref_ln(x + t2, params['norm4_g'], params['norm4_b'])
    return jnp.transpose(x, (1, 0, 2))


# ----------------------------------------------------------------------------
# Parameter init (deterministic, xavier-uniform style as in the module)
# ----------------------------------------------------------------------------
def init_params(key, d_model, dim_ff):
    ks = jax.random.split(key, 8)

    def xavier(k, shape):
        fan_out, fan_in = shape
        lim = math.sqrt(6.0 / (fan_in + fan_out))
        return jax.random.uniform(k, shape, jnp.float32, -lim, lim)

    p = {
        'cross_w_in': xavier(ks[0], (3 * d_model, d_model)),
        'cross_b_in': jnp.zeros((3 * d_model,), jnp.float32),
        'cross_w_out': xavier(ks[1], (d_model, d_model)),
        'cross_b_out': jnp.zeros((d_model,), jnp.float32),
        'self_w_in': xavier(ks[2], (3 * d_model, d_model)),
        'self_b_in': jnp.zeros((3 * d_model,), jnp.float32),
        'self_w_out': xavier(ks[3], (d_model, d_model)),
        'self_b_out': jnp.zeros((d_model,), jnp.float32),
        'w1': xavier(ks[4], (dim_ff, d_model)),
        'b1': jax.random.uniform(ks[5], (dim_ff,), jnp.float32, -0.1, 0.1),
        'w2': xavier(ks[6], (d_model, dim_ff)),
        'b2': jax.random.uniform(ks[7], (d_model,), jnp.float32, -0.1, 0.1),
    }
    for n in ('norm2', 'norm3', 'norm4'):
        p[f'{n}_g'] = jnp.ones((d_model,), jnp.float32)
        p[f'{n}_b'] = jnp.zeros((d_model,), jnp.float32)
    return p


if __name__ == "__main__":
    d_model, nhead, dim_ff = 32, 4, 64
    T, S, B = 8, 16, 2

    key = jax.random.PRNGKey(0)
    kp, kt, km, kqp, kpp = jax.random.split(key, 5)
    params = init_params(kp, d_model, dim_ff)

    tgt = jax.random.normal(kt, (T, B, d_model), jnp.float32)
    memory = jax.random.normal(km, (S, B, d_model), jnp.float32)
    query_pos = jax.random.normal(kqp, (T, B, d_model), jnp.float32)
    pos = jax.random.normal(kpp, (S, B, d_model), jnp.float32)
    cam_mask = jnp.zeros((B, T, S), jnp.float32)  # accepted, not used (TODO above)

    out = transformer_decoder_layer(params, tgt, memory, cam_mask,
                                    pos=pos, query_pos=query_pos, nhead=nhead)
    out = jax.block_until_ready(out)

    ref = _ref_layer(params, tgt, memory, pos, query_pos, nhead)
    err = float(jnp.max(jnp.abs(out - ref)))
    assert out.shape == (T, B, d_model), out.shape
    # Tolerance accounts for the approximate EUP reciprocal in the in-kernel
    # softmax normalization (pl.reciprocal(..., approx=True)).
    assert err < 1e-2, f"max abs diff vs reference: {err}"

    print("KERNEL_OK")
</pallas_src>

<mosaic_0001>
module attributes {stable_mosaic.version = 11 : i64} {
  func.func @_decoder_layer_kernel(%arg0: i32, %arg1: memref<1x8x32xf32, #tpu.memory_space<vmem>>, %arg2: memref<1x16x32xf32, #tpu.memory_space<vmem>>, %arg3: memref<1x8x32xf32, #tpu.memory_space<vmem>>, %arg4: memref<1x16x32xf32, #tpu.memory_space<vmem>>, %arg5: memref<32x96xf32, #tpu.memory_space<vmem>>, %arg6: memref<1x96xf32, #tpu.memory_space<vmem>>, %arg7: memref<32x32xf32, #tpu.memory_space<vmem>>, %arg8: memref<1x32xf32, #tpu.memory_space<vmem>>, %arg9: memref<32x96xf32, #tpu.memory_space<vmem>>, %arg10: memref<1x96xf32, #tpu.memory_space<vmem>>, %arg11: memref<32x32xf32, #tpu.memory_space<vmem>>, %arg12: memref<1x32xf32, #tpu.memory_space<vmem>>, %arg13: memref<32x64xf32, #tpu.memory_space<vmem>>, %arg14: memref<1x64xf32, #tpu.memory_space<vmem>>, %arg15: memref<64x32xf32, #tpu.memory_space<vmem>>, %arg16: memref<1x32xf32, #tpu.memory_space<vmem>>, %arg17: memref<1x32xf32, #tpu.memory_space<vmem>>, %arg18: memref<1x32xf32, #tpu.memory_space<vmem>>, %arg19: memref<1x32xf32, #tpu.memory_space<vmem>>, %arg20: memref<1x32xf32, #tpu.memory_space<vmem>>, %arg21: memref<1x32xf32, #tpu.memory_space<vmem>>, %arg22: memref<1x32xf32, #tpu.memory_space<vmem>>, %arg23: memref<1x8x32xf32, #tpu.memory_space<vmem>>) attributes {dimension_semantics = [#tpu.dimension_semantics<parallel>], iteration_bounds = array<i64: 2>, scalar_prefetch = 0 : i64, scratch_operands = 0 : i64, tpu.core_type = #tpu.core_type<tc>, window_params = [{transform_indices = @transform_0, window_bounds = array<i64: 1, 8, 32>}, {transform_indices = @transform_1, window_bounds = array<i64: 1, 16, 32>}, {transform_indices = @transform_2, window_bounds = array<i64: 1, 8, 32>}, {transform_indices = @transform_3, window_bounds = array<i64: 1, 16, 32>}, {pipeline_mode = #tpu.pipeline_mode<synchronous>, transform_indices = @transform_4, window_bounds = array<i64: 32, 96>}, {pipeline_mode = #tpu.pipeline_mode<synchronous>, transform_indices = @transform_5, window_bounds = array<i64: 1, 96>}, {pipeline_mode = #tpu.pipeline_mode<synchronous>, transform_indices = @transform_6, window_bounds = array<i64: 32, 32>}, {pipeline_mode = #tpu.pipeline_mode<synchronous>, transform_indices = @transform_7, window_bounds = array<i64: 1, 32>}, {pipeline_mode = #tpu.pipeline_mode<synchronous>, transform_indices = @transform_8, window_bounds = array<i64: 32, 96>}, {pipeline_mode = #tpu.pipeline_mode<synchronous>, transform_indices = @transform_9, window_bounds = array<i64: 1, 96>}, {pipeline_mode = #tpu.pipeline_mode<synchronous>, transform_indices = @transform_10, window_bounds = array<i64: 32, 32>}, {pipeline_mode = #tpu.pipeline_mode<synchronous>, transform_indices = @transform_11, window_bounds = array<i64: 1, 32>}, {pipeline_mode = #tpu.pipeline_mode<synchronous>, transform_indices = @transform_12, window_bounds = array<i64: 32, 64>}, {pipeline_mode = #tpu.pipeline_mode<synchronous>, transform_indices = @transform_13, window_bounds = array<i64: 1, 64>}, {pipeline_mode = #tpu.pipeline_mode<synchronous>, transform_indices = @transform_14, window_bounds = array<i64: 64, 32>}, {pipeline_mode = #tpu.pipeline_mode<synchronous>, transform_indices = @transform_15, window_bounds = array<i64: 1, 32>}, {pipeline_mode = #tpu.pipeline_mode<synchronous>, transform_indices = @transform_16, window_bounds = array<i64: 1, 32>}, {pipeline_mode = #tpu.pipeline_mode<synchronous>, transform_indices = @transform_17, window_bounds = array<i64: 1, 32>}, {pipeline_mode = #tpu.pipeline_mode<synchronous>, transform_indices = @transform_18, window_bounds = array<i64: 1, 32>}, {pipeline_mode = #tpu.pipeline_mode<synchronous>, transform_indices = @transform_19, window_bounds = array<i64: 1, 32>}, {pipeline_mode = #tpu.pipeline_mode<synchronous>, transform_indices = @transform_20, window_bounds = array<i64: 1, 32>}, {pipeline_mode = #tpu.pipeline_mode<synchronous>, transform_indices = @transform_21, window_bounds = array<i64: 1, 32>}, {transform_indices = @transform_22, window_bounds = array<i64: 1, 8, 32>}]} {
    %c0 = arith.constant 0 : index
    %c0_0 = arith.constant 0 : index
    %c0_1 = arith.constant 0 : index
    %0 = vector.load %arg1[%c0, %c0_0, %c0_1] : memref<1x8x32xf32, #tpu.memory_space<vmem>>, vector<1x8x32xf32>
    %1 = vector.shape_cast %0 : vector<1x8x32xf32> to vector<8x32xf32>
    %c0_2 = arith.constant 0 : index
    %c0_3 = arith.constant 0 : index
    %c0_4 = arith.constant 0 : index
    %2 = vector.load %arg2[%c0_2, %c0_3, %c0_4] : memref<1x16x32xf32, #tpu.memory_space<vmem>>, vector<1x16x32xf32>
    %3 = vector.shape_cast %2 : vector<1x16x32xf32> to vector<16x32xf32>
    %c0_5 = arith.constant 0 : index
    %c0_6 = arith.constant 0 : index
    %c0_7 = arith.constant 0 : index
    %4 = vector.load %arg3[%c0_5, %c0_6, %c0_7] : memref<1x8x32xf32, #tpu.memory_space<vmem>>, vector<1x8x32xf32>
    %5 = vector.shape_cast %4 : vector<1x8x32xf32> to vector<8x32xf32>
    %c0_8 = arith.constant 0 : index
    %c0_9 = arith.constant 0 : index
    %c0_10 = arith.constant 0 : index
    %6 = vector.load %arg4[%c0_8, %c0_9, %c0_10] : memref<1x16x32xf32, #tpu.memory_space<vmem>>, vector<1x16x32xf32>
    %7 = vector.shape_cast %6 : vector<1x16x32xf32> to vector<16x32xf32>
    %c0_11 = arith.constant 0 : index
    %c0_12 = arith.constant 0 : index
    %8 = vector.load %arg5[%c0_11, %c0_12] : memref<32x96xf32, #tpu.memory_space<vmem>>, vector<32x96xf32>
    %c0_13 = arith.constant 0 : index
    %c0_14 = arith.constant 0 : index
    %9 = vector.load %arg6[%c0_13, %c0_14] : memref<1x96xf32, #tpu.memory_space<vmem>>, vector<1x96xf32>
    %10 = vector.shape_cast %9 : vector<1x96xf32> to vector<96xf32>
    %11 = arith.addf %1, %5 : vector<8x32xf32>
    %12 = arith.addf %3, %7 : vector<16x32xf32>
    %13 = vector.extract_strided_slice %8 {offsets = [0, 0], sizes = [32, 32], strides = [1, 1]} : vector<32x96xf32> to vector<32x32xf32>
    %cst = arith.constant dense<0.000000e+00> : vector<8x32xf32>
    %14 = tpu.matmul %11, %13, %cst {dimension_numbers = #tpu.dot_dimension_numbers<[1], [0], [0], [1], [0, 0, 1, 1], [], []>} : vector<8x32xf32>, vector<32x32xf32>, vector<8x32xf32> -> vector<8x32xf32>
    %15 = vector.extract_strided_slice %10 {offsets = [0], sizes = [32], strides = [1]} : vector<96xf32> to vector<32xf32>
    %16 = vector.shape_cast %15 : vector<32xf32> to vector<1x32xf32>
    %17 = vector.broadcast %16 : vector<1x32xf32> to vector<8x32xf32>
    %18 = arith.addf %14, %17 : vector<8x32xf32>
    %19 = vector.extract_strided_slice %8 {offsets = [0, 32], sizes = [32, 32], strides = [1, 1]} : vector<32x96xf32> to vector<32x32xf32>
    %cst_15 = arith.constant dense<0.000000e+00> : vector<16x32xf32>
    %20 = tpu.matmul %12, %19, %cst_15 {dimension_numbers = #tpu.dot_dimension_numbers<[1], [0], [0], [1], [0, 0, 1, 1], [], []>} : vector<16x32xf32>, vector<32x32xf32>, vector<16x32xf32> -> vector<16x32xf32>
    %21 = vector.extract_strided_slice %10 {offsets = [32], sizes = [32], strides = [1]} : vector<96xf32> to vector<32xf32>
    %22 = vector.shape_cast %21 : vector<32xf32> to vector<1x32xf32>
    %23 = vector.broadcast %22 : vector<1x32xf32> to vector<16x32xf32>
    %24 = arith.addf %20, %23 : vector<16x32xf32>
    %25 = vector.extract_strided_slice %8 {offsets = [0, 64], sizes = [32, 32], strides = [1, 1]} : vector<32x96xf32> to vector<32x32xf32>
    %cst_16 = arith.constant dense<0.000000e+00> : vector<16x32xf32>
    %26 = tpu.matmul %3, %25, %cst_16 {dimension_numbers = #tpu.dot_dimension_numbers<[1], [0], [0], [1], [0, 0, 1, 1], [], []>} : vector<16x32xf32>, vector<32x32xf32>, vector<16x32xf32> -> vector<16x32xf32>
    %27 = vector.extract_strided_slice %10 {offsets = [64], sizes = [32], strides = [1]} : vector<96xf32> to vector<32xf32>
    %28 = vector.shape_cast %27 : vector<32xf32> to vector<1x32xf32>
    %29 = vector.broadcast %28 : vector<1x32xf32> to vector<16x32xf32>
    %30 = arith.addf %26, %29 : vector<16x32xf32>
    %c0_17 = arith.constant 0 : index
    %c0_18 = arith.constant 0 : index
    %31 = vector.load %arg7[%c0_17, %c0_18] : memref<32x32xf32, #tpu.memory_space<vmem>>, vector<32x32xf32>
    %cst_19 = arith.constant 0.353553385 : f32
    %32 = vector.broadcast %cst_19 : f32 to vector<8x32xf32>
    %33 = arith.mulf %18, %32 : vector<8x32xf32>
    %cst_20 = arith.constant 0.000000e+00 : f32
    %34 = vector.broadcast %cst_20 : f32 to vector<8x32xf32>
    %35 = vector.extract_strided_slice %33 {offsets = [0, 0], sizes = [8, 8], strides = [1, 1]} : vector<8x32xf32> to vector<8x8xf32>
    %36 = vector.extract_strided_slice %24 {offsets = [0, 0], sizes = [16, 8], strides = [1, 1]} : vector<16x32xf32> to vector<16x8xf32>
    %37 = vector.extract_strided_slice %30 {offsets = [0, 0], sizes = [16, 8], strides = [1, 1]} : vector<16x32xf32> to vector<16x8xf32>
    %cst_21 = arith.constant dense<0.000000e+00> : vector<8x16xf32>
    %38 = tpu.matmul %35, %36, %cst_21 {dimension_numbers = #tpu.dot_dimension_numbers<[1], [1], [0], [0], [0, 0, 1, 0], [], []>} : vector<8x8xf32>, vector<16x8xf32>, vector<8x16xf32> -> vector<8x16xf32>
    %cst_22 = arith.constant dense<0xFF800000> : vector<8xf32>
    %39 = vector.multi_reduction <maximumf>, %38, %cst_22 [1] : vector<8x16xf32> to vector<8xf32>
    %40 = vector.shape_cast %39 : vector<8xf32> to vector<8x1xf32>
    %41 = vector.broadcast %40 : vector<8x1xf32> to vector<8x16xf32>
    %42 = arith.subf %38, %41 : vector<8x16xf32>
    %43 = math.exp %42 : vector<8x16xf32>
    %cst_23 = arith.constant dense<0.000000e+00> : vector<8xf32>
    %44 = vector.multi_reduction <add>, %43, %cst_23 [1] : vector<8x16xf32> to vector<8xf32>
    %45 = vector.shape_cast %44 : vector<8xf32> to vector<8x1xf32>
    %46 = tpu.reciprocal %45 {approx = true} : vector<8x1xf32> -> vector<8x1xf32>
    %47 = vector.broadcast %46 : vector<8x1xf32> to vector<8x16xf32>
    %48 = arith.mulf %43, %47 : vector<8x16xf32>
    %cst_24 = arith.constant dense<0.000000e+00> : vector<8x8xf32>
    %49 = tpu.matmul %48, %37, %cst_24 {dimension_numbers = #tpu.dot_dimension_numbers<[1], [0], [0], [1], [0, 0, 1, 1], [], []>} : vector<8x16xf32>, vector<16x8xf32>, vector<8x8xf32> -> vector<8x8xf32>
    %50 = vector.extract_strided_slice %31 {offsets = [0, 0], sizes = [8, 32], strides = [1, 1]} : vector<32x32xf32> to vector<8x32xf32>
    %cst_25 = arith.constant dense<0.000000e+00> : vector<8x32xf32>
    %51 = tpu.matmul %49, %50, %cst_25 {dimension_numbers = #tpu.dot_dimension_numbers<[1], [0], [0], [1], [0, 0, 1, 1], [], []>} : vector<8x8xf32>, vector<8x32xf32>, vector<8x32xf32> -> vector<8x32xf32>
    %52 = arith.addf %34, %51 : vector<8x32xf32>
    %53 = vector.extract_strided_slice %33 {offsets = [0, 8], sizes = [8, 8], strides = [1, 1]} : vector<8x32xf32> to vector<8x8xf32>
    %54 = vector.extract_strided_slice %24 {offsets = [0, 8], sizes = [16, 8], strides = [1, 1]} : vector<16x32xf32> to vector<16x8xf32>
    %55 = vector.extract_strided_slice %30 {offsets = [0, 8], sizes = [16, 8], strides = [1, 1]} : vector<16x32xf32> to vector<16x8xf32>
    %cst_26 = arith.constant dense<0.000000e+00> : vector<8x16xf32>
    %56 = tpu.matmul %53, %54, %cst_26 {dimension_numbers = #tpu.dot_dimension_numbers<[1], [1], [0], [0], [0, 0, 1, 0], [], []>} : vector<8x8xf32>, vector<16x8xf32>, vector<8x16xf32> -> vector<8x16xf32>
    %cst_27 = arith.constant dense<0xFF800000> : vector<8xf32>
    %57 = vector.multi_reduction <maximumf>, %56, %cst_27 [1] : vector<8x16xf32> to vector<8xf32>
    %58 = vector.shape_cast %57 : vector<8xf32> to vector<8x1xf32>
    %59 = vector.broadcast %58 : vector<8x1xf32> to vector<8x16xf32>
    %60 = arith.subf %56, %59 : vector<8x16xf32>
    %61 = math.exp %60 : vector<8x16xf32>
    %cst_28 = arith.constant dense<0.000000e+00> : vector<8xf32>
    %62 = vector.multi_reduction <add>, %61, %cst_28 [1] : vector<8x16xf32> to vector<8xf32>
    %63 = vector.shape_cast %62 : vector<8xf32> to vector<8x1xf32>
    %64 = tpu.reciprocal %63 {approx = true} : vector<8x1xf32> -> vector<8x1xf32>
    %65 = vector.broadcast %64 : vector<8x1xf32> to vector<8x16xf32>
    %66 = arith.mulf %61, %65 : vector<8x16xf32>
    %cst_29 = arith.constant dense<0.000000e+00> : vector<8x8xf32>
    %67 = tpu.matmul %66, %55, %cst_29 {dimension_numbers = #tpu.dot_dimension_numbers<[1], [0], [0], [1], [0, 0, 1, 1], [], []>} : vector<8x16xf32>, vector<16x8xf32>, vector<8x8xf32> -> vector<8x8xf32>
    %68 = vector.extract_strided_slice %31 {offsets = [8, 0], sizes = [8, 32], strides = [1, 1]} : vector<32x32xf32> to vector<8x32xf32>
    %cst_30 = arith.constant dense<0.000000e+00> : vector<8x32xf32>
    %69 = tpu.matmul %67, %68, %cst_30 {dimension_numbers = #tpu.dot_dimension_numbers<[1], [0], [0], [1], [0, 0, 1, 1], [], []>} : vector<8x8xf32>, vector<8x32xf32>, vector<8x32xf32> -> vector<8x32xf32>
    %70 = arith.addf %52, %69 : vector<8x32xf32>
    %71 = vector.extract_strided_slice %33 {offsets = [0, 16], sizes = [8, 8], strides = [1, 1]} : vector<8x32xf32> to vector<8x8xf32>
    %72 = vector.extract_strided_slice %24 {offsets = [0, 16], sizes = [16, 8], strides = [1, 1]} : vector<16x32xf32> to vector<16x8xf32>
    %73 = vector.extract_strided_slice %30 {offsets = [0, 16], sizes = [16, 8], strides = [1, 1]} : vector<16x32xf32> to vector<16x8xf32>
    %cst_31 = arith.constant dense<0.000000e+00> : vector<8x16xf32>
    %74 = tpu.matmul %71, %72, %cst_31 {dimension_numbers = #tpu.dot_dimension_numbers<[1], [1], [0], [0], [0, 0, 1, 0], [], []>} : vector<8x8xf32>, vector<16x8xf32>, vector<8x16xf32> -> vector<8x16xf32>
    %cst_32 = arith.constant dense<0xFF800000> : vector<8xf32>
    %75 = vector.multi_reduction <maximumf>, %74, %cst_32 [1] : vector<8x16xf32> to vector<8xf32>
    %76 = vector.shape_cast %75 : vector<8xf32> to vector<8x1xf32>
    %77 = vector.broadcast %76 : vector<8x1xf32> to vector<8x16xf32>
    %78 = arith.subf %74, %77 : vector<8x16xf32>
    %79 = math.exp %78 : vector<8x16xf32>
    %cst_33 = arith.constant dense<0.000000e+00> : vector<8xf32>
    %80 = vector.multi_reduction <add>, %79, %cst_33 [1] : vector<8x16xf32> to vector<8xf32>
    %81 = vector.shape_cast %80 : vector<8xf32> to vector<8x1xf32>
    %82 = tpu.reciprocal %81 {approx = true} : vector<8x1xf32> -> vector<8x1xf32>
    %83 = vector.broadcast %82 : vector<8x1xf32> to vector<8x16xf32>
    %84 = arith.mulf %79, %83 : vector<8x16xf32>
    %cst_34 = arith.constant dense<0.000000e+00> : vector<8x8xf32>
    %85 = tpu.matmul %84, %73, %cst_34 {dimension_numbers = #tpu.dot_dimension_numbers<[1], [0], [0], [1], [0, 0, 1, 1], [], []>} : vector<8x16xf32>, vector<16x8xf32>, vector<8x8xf32> -> vector<8x8xf32>
    %86 = vector.extract_strided_slice %31 {offsets = [16, 0], sizes = [8, 32], strides = [1, 1]} : vector<32x32xf32> to vector<8x32xf32>
    %cst_35 = arith.constant dense<0.000000e+00> : vector<8x32xf32>
    %87 = tpu.matmul %85, %86, %cst_35 {dimension_numbers = #tpu.dot_dimension_numbers<[1], [0], [0], [1], [0, 0, 1, 1], [], []>} : vector<8x8xf32>, vector<8x32xf32>, vector<8x32xf32> -> vector<8x32xf32>
    %88 = arith.addf %70, %87 : vector<8x32xf32>
    %89 = vector.extract_strided_slice %33 {offsets = [0, 24], sizes = [8, 8], strides = [1, 1]} : vector<8x32xf32> to vector<8x8xf32>
    %90 = vector.extract_strided_slice %24 {offsets = [0, 24], sizes = [16, 8], strides = [1, 1]} : vector<16x32xf32> to vector<16x8xf32>
    %91 = vector.extract_strided_slice %30 {offsets = [0, 24], sizes = [16, 8], strides = [1, 1]} : vector<16x32xf32> to vector<16x8xf32>
    %cst_36 = arith.constant dense<0.000000e+00> : vector<8x16xf32>
    %92 = tpu.matmul %89, %90, %cst_36 {dimension_numbers = #tpu.dot_dimension_numbers<[1], [1], [0], [0], [0, 0, 1, 0], [], []>} : vector<8x8xf32>, vector<16x8xf32>, vector<8x16xf32> -> vector<8x16xf32>
    %cst_37 = arith.constant dense<0xFF800000> : vector<8xf32>
    %93 = vector.multi_reduction <maximumf>, %92, %cst_37 [1] : vector<8x16xf32> to vector<8xf32>
    %94 = vector.shape_cast %93 : vector<8xf32> to vector<8x1xf32>
    %95 = vector.broadcast %94 : vector<8x1xf32> to vector<8x16xf32>
    %96 = arith.subf %92, %95 : vector<8x16xf32>
    %97 = math.exp %96 : vector<8x16xf32>
    %cst_38 = arith.constant dense<0.000000e+00> : vector<8xf32>
    %98 = vector.multi_reduction <add>, %97, %cst_38 [1] : vector<8x16xf32> to vector<8xf32>
    %99 = vector.shape_cast %98 : vector<8xf32> to vector<8x1xf32>
    %100 = tpu.reciprocal %99 {approx = true} : vector<8x1xf32> -> vector<8x1xf32>
    %101 = vector.broadcast %100 : vector<8x1xf32> to vector<8x16xf32>
    %102 = arith.mulf %97, %101 : vector<8x16xf32>
    %cst_39 = arith.constant dense<0.000000e+00> : vector<8x8xf32>
    %103 = tpu.matmul %102, %91, %cst_39 {dimension_numbers = #tpu.dot_dimension_numbers<[1], [0], [0], [1], [0, 0, 1, 1], [], []>} : vector<8x16xf32>, vector<16x8xf32>, vector<8x8xf32> -> vector<8x8xf32>
    %104 = vector.extract_strided_slice %31 {offsets = [24, 0], sizes = [8, 32], strides = [1, 1]} : vector<32x32xf32> to vector<8x32xf32>
    %cst_40 = arith.constant dense<0.000000e+00> : vector<8x32xf32>
    %105 = tpu.matmul %103, %104, %cst_40 {dimension_numbers = #tpu.dot_dimension_numbers<[1], [0], [0], [1], [0, 0, 1, 1], [], []>} : vector<8x8xf32>, vector<8x32xf32>, vector<8x32xf32> -> vector<8x32xf32>
    %106 = arith.addf %88, %105 : vector<8x32xf32>
    %c0_41 = arith.constant 0 : index
    %c0_42 = arith.constant 0 : index
    %107 = vector.load %arg8[%c0_41, %c0_42] : memref<1x32xf32, #tpu.memory_space<vmem>>, vector<1x32xf32>
    %108 = vector.shape_cast %107 : vector<1x32xf32> to vector<32xf32>
    %109 = vector.shape_cast %108 : vector<32xf32> to vector<1x32xf32>
    %110 = vector.broadcast %109 : vector<1x32xf32> to vector<8x32xf32>
    %111 = arith.addf %106, %110 : vector<8x32xf32>
    %c0_43 = arith.constant 0 : index
    %c0_44 = arith.constant 0 : index
    %112 = vector.load %arg17[%c0_43, %c0_44] : memref<1x32xf32, #tpu.memory_space<vmem>>, vector<1x32xf32>
    %113 = vector.shape_cast %112 : vector<1x32xf32> to vector<32xf32>
    %c0_45 = arith.constant 0 : index
    %c0_46 = arith.constant 0 : index
    %114 = vector.load %arg18[%c0_45, %c0_46] : memref<1x32xf32, #tpu.memory_space<vmem>>, vector<1x32xf32>
    %115 = vector.shape_cast %114 : vector<1x32xf32> to vector<32xf32>
    %116 = arith.addf %1, %111 : vector<8x32xf32>
    %cst_47 = arith.constant dense<0.000000e+00> : vector<8xf32>
    %117 = vector.multi_reduction <add>, %116, %cst_47 [1] : vector<8x32xf32> to vector<8xf32>
    %118 = vector.shape_cast %117 : vector<8xf32> to vector<8x1xf32>
    %cst_48 = arith.constant 3.200000e+01 : f32
    %119 = vector.broadcast %cst_48 : f32 to vector<8x1xf32>
    %120 = arith.divf %118, %119 : vector<8x1xf32>
    %121 = vector.broadcast %120 : vector<8x1xf32> to vector<8x32xf32>
    %122 = arith.subf %116, %121 : vector<8x32xf32>
    %123 = arith.mulf %122, %122 : vector<8x32xf32>
    %cst_49 = arith.constant dense<0.000000e+00> : vector<8xf32>
    %124 = vector.multi_reduction <add>, %123, %cst_49 [1] : vector<8x32xf32> to vector<8xf32>
    %125 = vector.shape_cast %124 : vector<8xf32> to vector<8x1xf32>
    %cst_50 = arith.constant 3.200000e+01 : f32
    %126 = vector.broadcast %cst_50 : f32 to vector<8x1xf32>
    %127 = arith.divf %125, %126 : vector<8x1xf32>
    %cst_51 = arith.constant 9.99999974E-6 : f32
    %128 = vector.broadcast %cst_51 : f32 to vector<8x1xf32>
    %129 = arith.addf %127, %128 : vector<8x1xf32>
    %130 = math.rsqrt %129 : vector<8x1xf32>
    %131 = vector.broadcast %130 : vector<8x1xf32> to vector<8x32xf32>
    %132 = arith.mulf %122, %131 : vector<8x32xf32>
    %133 = vector.shape_cast %113 : vector<32xf32> to vector<1x32xf32>
    %134 = vector.broadcast %133 : vector<1x32xf32> to vector<8x32xf32>
    %135 = arith.mulf %132, %134 : vector<8x32xf32>
    %136 = vector.shape_cast %115 : vector<32xf32> to vector<1x32xf32>
    %137 = vector.broadcast %136 : vector<1x32xf32> to vector<8x32xf32>
    %138 = arith.addf %135, %137 : vector<8x32xf32>
    %c0_52 = arith.constant 0 : index
    %c0_53 = arith.constant 0 : index
    %139 = vector.load %arg9[%c0_52, %c0_53] : memref<32x96xf32, #tpu.memory_space<vmem>>, vector<32x96xf32>
    %c0_54 = arith.constant 0 : index
    %c0_55 = arith.constant 0 : index
    %140 = vector.load %arg10[%c0_54, %c0_55] : memref<1x96xf32, #tpu.memory_space<vmem>>, vector<1x96xf32>
    %141 = vector.shape_cast %140 : vector<1x96xf32> to vector<96xf32>
    %142 = arith.addf %138, %5 : vector<8x32xf32>
    %143 = vector.extract_strided_slice %139 {offsets = [0, 0], sizes = [32, 64], strides = [1, 1]} : vector<32x96xf32> to vector<32x64xf32>
    %cst_56 = arith.constant dense<0.000000e+00> : vector<8x64xf32>
    %144 = tpu.matmul %142, %143, %cst_56 {dimension_numbers = #tpu.dot_dimension_numbers<[1], [0], [0], [1], [0, 0, 1, 1], [], []>} : vector<8x32xf32>, vector<32x64xf32>, vector<8x64xf32> -> vector<8x64xf32>
    %145 = vector.extract_strided_slice %141 {offsets = [0], sizes = [64], strides = [1]} : vector<96xf32> to vector<64xf32>
    %146 = vector.shape_cast %145 : vector<64xf32> to vector<1x64xf32>
    %147 = vector.broadcast %146 : vector<1x64xf32> to vector<8x64xf32>
    %148 = arith.addf %144, %147 : vector<8x64xf32>
    %149 = vector.extract_strided_slice %148 {offsets = [0, 0], sizes = [8, 32], strides = [1, 1]} : vector<8x64xf32> to vector<8x32xf32>
    %150 = vector.extract_strided_slice %148 {offsets = [0, 32], sizes = [8, 32], strides = [1, 1]} : vector<8x64xf32> to vector<8x32xf32>
    %151 = vector.extract_strided_slice %139 {offsets = [0, 64], sizes = [32, 32], strides = [1, 1]} : vector<32x96xf32> to vector<32x32xf32>
    %cst_57 = arith.constant dense<0.000000e+00> : vector<8x32xf32>
    %152 = tpu.matmul %138, %151, %cst_57 {dimension_numbers = #tpu.dot_dimension_numbers<[1], [0], [0], [1], [0, 0, 1, 1], [], []>} : vector<8x32xf32>, vector<32x32xf32>, vector<8x32xf32> -> vector<8x32xf32>
    %153 = vector.extract_strided_slice %141 {offsets = [64], sizes = [32], strides = [1]} : vector<96xf32> to vector<32xf32>
    %154 = vector.shape_cast %153 : vector<32xf32> to vector<1x32xf32>
    %155 = vector.broadcast %154 : vector<1x32xf32> to vector<8x32xf32>
    %156 = arith.addf %152, %155 : vector<8x32xf32>
    %c0_58 = arith.constant 0 : index
    %c0_59 = arith.constant 0 : index
    %157 = vector.load %arg11[%c0_58, %c0_59] : memref<32x32xf32, #tpu.memory_space<vmem>>, vector<32x32xf32>
    %cst_60 = arith.constant 0.353553385 : f32
    %158 = vector.broadcast %cst_60 : f32 to vector<8x32xf32>
    %159 = arith.mulf %149, %158 : vector<8x32xf32>
    %cst_61 = arith.constant 0.000000e+00 : f32
    %160 = vector.broadcast %cst_61 : f32 to vector<8x32xf32>
    %161 = vector.extract_strided_slice %159 {offsets = [0, 0], sizes = [8, 8], strides = [1, 1]} : vector<8x32xf32> to vector<8x8xf32>
    %162 = vector.extract_strided_slice %150 {offsets = [0, 0], sizes = [8, 8], strides = [1, 1]} : vector<8x32xf32> to vector<8x8xf32>
    %163 = vector.extract_strided_slice %156 {offsets = [0, 0], sizes = [8, 8], strides = [1, 1]} : vector<8x32xf32> to vector<8x8xf32>
    %cst_62 = arith.constant dense<0.000000e+00> : vector<8x8xf32>
    %164 = tpu.matmul %161, %162, %cst_62 {dimension_numbers = #tpu.dot_dimension_numbers<[1], [1], [0], [0], [0, 0, 1, 0], [], []>} : vector<8x8xf32>, vector<8x8xf32>, vector<8x8xf32> -> vector<8x8xf32>
    %cst_63 = arith.constant dense<0xFF800000> : vector<8xf32>
    %165 = vector.multi_reduction <maximumf>, %164, %cst_63 [1] : vector<8x8xf32> to vector<8xf32>
    %166 = vector.shape_cast %165 : vector<8xf32> to vector<8x1xf32>
    %167 = vector.broadcast %166 : vector<8x1xf32> to vector<8x8xf32>
    %168 = arith.subf %164, %167 : vector<8x8xf32>
    %169 = math.exp %168 : vector<8x8xf32>
    %cst_64 = arith.constant dense<0.000000e+00> : vector<8xf32>
    %170 = vector.multi_reduction <add>, %169, %cst_64 [1] : vector<8x8xf32> to vector<8xf32>
    %171 = vector.shape_cast %170 : vector<8xf32> to vector<8x1xf32>
    %172 = tpu.reciprocal %171 {approx = true} : vector<8x1xf32> -> vector<8x1xf32>
    %173 = vector.broadcast %172 : vector<8x1xf32> to vector<8x8xf32>
    %174 = arith.mulf %169, %173 : vector<8x8xf32>
    %cst_65 = arith.constant dense<0.000000e+00> : vector<8x8xf32>
    %175 = tpu.matmul %174, %163, %cst_65 {dimension_numbers = #tpu.dot_dimension_numbers<[1], [0], [0], [1], [0, 0, 1, 1], [], []>} : vector<8x8xf32>, vector<8x8xf32>, vector<8x8xf32> -> vector<8x8xf32>
    %176 = vector.extract_strided_slice %157 {offsets = [0, 0], sizes = [8, 32], strides = [1, 1]} : vector<32x32xf32> to vector<8x32xf32>
    %cst_66 = arith.constant dense<0.000000e+00> : vector<8x32xf32>
    %177 = tpu.matmul %175, %176, %cst_66 {dimension_numbers = #tpu.dot_dimension_numbers<[1], [0], [0], [1], [0, 0, 1, 1], [], []>} : vector<8x8xf32>, vector<8x32xf32>, vector<8x32xf32> -> vector<8x32xf32>
    %178 = arith.addf %160, %177 : vector<8x32xf32>
    %179 = vector.extract_strided_slice %159 {offsets = [0, 8], sizes = [8, 8], strides = [1, 1]} : vector<8x32xf32> to vector<8x8xf32>
    %180 = vector.extract_strided_slice %150 {offsets = [0, 8], sizes = [8, 8], strides = [1, 1]} : vector<8x32xf32> to vector<8x8xf32>
    %181 = vector.extract_strided_slice %156 {offsets = [0, 8], sizes = [8, 8], strides = [1, 1]} : vector<8x32xf32> to vector<8x8xf32>
    %cst_67 = arith.constant dense<0.000000e+00> : vector<8x8xf32>
    %182 = tpu.matmul %179, %180, %cst_67 {dimension_numbers = #tpu.dot_dimension_numbers<[1], [1], [0], [0], [0, 0, 1, 0], [], []>} : vector<8x8xf32>, vector<8x8xf32>, vector<8x8xf32> -> vector<8x8xf32>
    %cst_68 = arith.constant dense<0xFF800000> : vector<8xf32>
    %183 = vector.multi_reduction <maximumf>, %182, %cst_68 [1] : vector<8x8xf32> to vector<8xf32>
    %184 = vector.shape_cast %183 : vector<8xf32> to vector<8x1xf32>
    %185 = vector.broadcast %184 : vector<8x1xf32> to vector<8x8xf32>
    %186 = arith.subf %182, %185 : vector<8x8xf32>
    %187 = math.exp %186 : vector<8x8xf32>
    %cst_69 = arith.constant dense<0.000000e+00> : vector<8xf32>
    %188 = vector.multi_reduction <add>, %187, %cst_69 [1] : vector<8x8xf32> to vector<8xf32>
    %189 = vector.shape_cast %188 : vector<8xf32> to vector<8x1xf32>
    %190 = tpu.reciprocal %189 {approx = true} : vector<8x1xf32> -> vector<8x1xf32>
    %191 = vector.broadcast %190 : vector<8x1xf32> to vector<8x8xf32>
    %192 = arith.mulf %187, %191 : vector<8x8xf32>
    %cst_70 = arith.constant dense<0.000000e+00> : vector<8x8xf32>
    %193 = tpu.matmul %192, %181, %cst_70 {dimension_numbers = #tpu.dot_dimension_numbers<[1], [0], [0], [1], [0, 0, 1, 1], [], []>} : vector<8x8xf32>, vector<8x8xf32>, vector<8x8xf32> -> vector<8x8xf32>
    %194 = vector.extract_strided_slice %157 {offsets = [8, 0], sizes = [8, 32], strides = [1, 1]} : vector<32x32xf32> to vector<8x32xf32>
    %cst_71 = arith.constant dense<0.000000e+00> : vector<8x32xf32>
    %195 = tpu.matmul %193, %194, %cst_71 {dimension_numbers = #tpu.dot_dimension_numbers<[1], [0], [0], [1], [0, 0, 1, 1], [], []>} : vector<8x8xf32>, vector<8x32xf32>, vector<8x32xf32> -> vector<8x32xf32>
    %196 = arith.addf %178, %195 : vector<8x32xf32>
    %197 = vector.extract_strided_slice %159 {offsets = [0, 16], sizes = [8, 8], strides = [1, 1]} : vector<8x32xf32> to vector<8x8xf32>
    %198 = vector.extract_strided_slice %150 {offsets = [0, 16], sizes = [8, 8], strides = [1, 1]} : vector<8x32xf32> to vector<8x8xf32>
    %199 = vector.extract_strided_slice %156 {offsets = [0, 16], sizes = [8, 8], strides = [1, 1]} : vector<8x32xf32> to vector<8x8xf32>
    %cst_72 = arith.constant dense<0.000000e+00> : vector<8x8xf32>
    %200 = tpu.matmul %197, %198, %cst_72 {dimension_numbers = #tpu.dot_dimension_numbers<[1], [1], [0], [0], [0, 0, 1, 0], [], []>} : vector<8x8xf32>, vector<8x8xf32>, vector<8x8xf32> -> vector<8x8xf32>
    %cst_73 = arith.constant dense<0xFF800000> : vector<8xf32>
    %201 = vector.multi_reduction <maximumf>, %200, %cst_73 [1] : vector<8x8xf32> to vector<8xf32>
    %202 = vector.shape_cast %201 : vector<8xf32> to vector<8x1xf32>
    %203 = vector.broadcast %202 : vector<8x1xf32> to vector<8x8xf32>
    %204 = arith.subf %200, %203 : vector<8x8xf32>
    %205 = math.exp %204 : vector<8x8xf32>
    %cst_74 = arith.constant dense<0.000000e+00> : vector<8xf32>
    %206 = vector.multi_reduction <add>, %205, %cst_74 [1] : vector<8x8xf32> to vector<8xf32>
    %207 = vector.shape_cast %206 : vector<8xf32> to vector<8x1xf32>
    %208 = tpu.reciprocal %207 {approx = true} : vector<8x1xf32> -> vector<8x1xf32>
    %209 = vector.broadcast %208 : vector<8x1xf32> to vector<8x8xf32>
    %210 = arith.mulf %205, %209 : vector<8x8xf32>
    %cst_75 = arith.constant dense<0.000000e+00> : vector<8x8xf32>
    %211 = tpu.matmul %210, %199, %cst_75 {dimension_numbers = #tpu.dot_dimension_numbers<[1], [0], [0], [1], [0, 0, 1, 1], [], []>} : vector<8x8xf32>, vector<8x8xf32>, vector<8x8xf32> -> vector<8x8xf32>
    %212 = vector.extract_strided_slice %157 {offsets = [16, 0], sizes = [8, 32], strides = [1, 1]} : vector<32x32xf32> to vector<8x32xf32>
    %cst_76 = arith.constant dense<0.000000e+00> : vector<8x32xf32>
    %213 = tpu.matmul %211, %212, %cst_76 {dimension_numbers = #tpu.dot_dimension_numbers<[1], [0], [0], [1], [0, 0, 1, 1], [], []>} : vector<8x8xf32>, vector<8x32xf32>, vector<8x32xf32> -> vector<8x32xf32>
    %214 = arith.addf %196, %213 : vector<8x32xf32>
    %215 = vector.extract_strided_slice %159 {offsets = [0, 24], sizes = [8, 8], strides = [1, 1]} : vector<8x32xf32> to vector<8x8xf32>
    %216 = vector.extract_strided_slice %150 {offsets = [0, 24], sizes = [8, 8], strides = [1, 1]} : vector<8x32xf32> to vector<8x8xf32>
    %217 = vector.extract_strided_slice %156 {offsets = [0, 24], sizes = [8, 8], strides = [1, 1]} : vector<8x32xf32> to vector<8x8xf32>
    %cst_77 = arith.constant dense<0.000000e+00> : vector<8x8xf32>
    %218 = tpu.matmul %215, %216, %cst_77 {dimension_numbers = #tpu.dot_dimension_numbers<[1], [1], [0], [0], [0, 0, 1, 0], [], []>} : vector<8x8xf32>, vector<8x8xf32>, vector<8x8xf32> -> vector<8x8xf32>
    %cst_78 = arith.constant dense<0xFF800000> : vector<8xf32>
    %219 = vector.multi_reduction <maximumf>, %218, %cst_78 [1] : vector<8x8xf32> to vector<8xf32>
    %220 = vector.shape_cast %219 : vector<8xf32> to vector<8x1xf32>
    %221 = vector.broadcast %220 : vector<8x1xf32> to vector<8x8xf32>
    %222 = arith.subf %218, %221 : vector<8x8xf32>
    %223 = math.exp %222 : vector<8x8xf32>
    %cst_79 = arith.constant dense<0.000000e+00> : vector<8xf32>
    %224 = vector.multi_reduction <add>, %223, %cst_79 [1] : vector<8x8xf32> to vector<8xf32>
    %225 = vector.shape_cast %224 : vector<8xf32> to vector<8x1xf32>
    %226 = tpu.reciprocal %225 {approx = true} : vector<8x1xf32> -> vector<8x1xf32>
    %227 = vector.broadcast %226 : vector<8x1xf32> to vector<8x8xf32>
    %228 = arith.mulf %223, %227 : vector<8x8xf32>
    %cst_80 = arith.constant dense<0.000000e+00> : vector<8x8xf32>
    %229 = tpu.matmul %228, %217, %cst_80 {dimension_numbers = #tpu.dot_dimension_numbers<[1], [0], [0], [1], [0, 0, 1, 1], [], []>} : vector<8x8xf32>, vector<8x8xf32>, vector<8x8xf32> -> vector<8x8xf32>
    %230 = vector.extract_strided_slice %157 {offsets = [24, 0], sizes = [8, 32], strides = [1, 1]} : vector<32x32xf32> to vector<8x32xf32>
    %cst_81 = arith.constant dense<0.000000e+00> : vector<8x32xf32>
    %231 = tpu.matmul %229, %230, %cst_81 {dimension_numbers = #tpu.dot_dimension_numbers<[1], [0], [0], [1], [0, 0, 1, 1], [], []>} : vector<8x8xf32>, vector<8x32xf32>, vector<8x32xf32> -> vector<8x32xf32>
    %232 = arith.addf %214, %231 : vector<8x32xf32>
    %c0_82 = arith.constant 0 : index
    %c0_83 = arith.constant 0 : index
    %233 = vector.load %arg12[%c0_82, %c0_83] : memref<1x32xf32, #tpu.memory_space<vmem>>, vector<1x32xf32>
    %234 = vector.shape_cast %233 : vector<1x32xf32> to vector<32xf32>
    %235 = vector.shape_cast %234 : vector<32xf32> to vector<1x32xf32>
    %236 = vector.broadcast %235 : vector<1x32xf32> to vector<8x32xf32>
    %237 = arith.addf %232, %236 : vector<8x32xf32>
    %c0_84 = arith.constant 0 : index
    %c0_85 = arith.constant 0 : index
    %238 = vector.load %arg19[%c0_84, %c0_85] : memref<1x32xf32, #tpu.memory_space<vmem>>, vector<1x32xf32>
    %239 = vector.shape_cast %238 : vector<1x32xf32> to vector<32xf32>
    %c0_86 = arith.constant 0 : index
    %c0_87 = arith.constant 0 : index
    %240 = vector.load %arg20[%c0_86, %c0_87] : memref<1x32xf32, #tpu.memory_space<vmem>>, vector<1x32xf32>
    %241 = vector.shape_cast %240 : vector<1x32xf32> to vector<32xf32>
    %242 = arith.addf %138, %237 : vector<8x32xf32>
    %cst_88 = arith.constant dense<0.000000e+00> : vector<8xf32>
    %243 = vector.multi_reduction <add>, %242, %cst_88 [1] : vector<8x32xf32> to vector<8xf32>
    %244 = vector.shape_cast %243 : vector<8xf32> to vector<8x1xf32>
    %cst_89 = arith.constant 3.200000e+01 : f32
    %245 = vector.broadcast %cst_89 : f32 to vector<8x1xf32>
    %246 = arith.divf %244, %245 : vector<8x1xf32>
    %247 = vector.broadcast %246 : vector<8x1xf32> to vector<8x32xf32>
    %248 = arith.subf %242, %247 : vector<8x32xf32>
    %249 = arith.mulf %248, %248 : vector<8x32xf32>
    %cst_90 = arith.constant dense<0.000000e+00> : vector<8xf32>
    %250 = vector.multi_reduction <add>, %249, %cst_90 [1] : vector<8x32xf32> to vector<8xf32>
    %251 = vector.shape_cast %250 : vector<8xf32> to vector<8x1xf32>
    %cst_91 = arith.constant 3.200000e+01 : f32
    %252 = vector.broadcast %cst_91 : f32 to vector<8x1xf32>
    %253 = arith.divf %251, %252 : vector<8x1xf32>
    %cst_92 = arith.constant 9.99999974E-6 : f32
    %254 = vector.broadcast %cst_92 : f32 to vector<8x1xf32>
    %255 = arith.addf %253, %254 : vector<8x1xf32>
    %256 = math.rsqrt %255 : vector<8x1xf32>
    %257 = vector.broadcast %256 : vector<8x1xf32> to vector<8x32xf32>
    %258 = arith.mulf %248, %257 : vector<8x32xf32>
    %259 = vector.shape_cast %239 : vector<32xf32> to vector<1x32xf32>
    %260 = vector.broadcast %259 : vector<1x32xf32> to vector<8x32xf32>
    %261 = arith.mulf %258, %260 : vector<8x32xf32>
    %262 = vector.shape_cast %241 : vector<32xf32> to vector<1x32xf32>
    %263 = vector.broadcast %262 : vector<1x32xf32> to vector<8x32xf32>
    %264 = arith.addf %261, %263 : vector<8x32xf32>
    %c0_93 = arith.constant 0 : index
    %c0_94 = arith.constant 0 : index
    %265 = vector.load %arg13[%c0_93, %c0_94] : memref<32x64xf32, #tpu.memory_space<vmem>>, vector<32x64xf32>
    %cst_95 = arith.constant dense<0.000000e+00> : vector<8x64xf32>
    %266 = tpu.matmul %264, %265, %cst_95 {dimension_numbers = #tpu.dot_dimension_numbers<[1], [0], [0], [1], [0, 0, 1, 1], [], []>} : vector<8x32xf32>, vector<32x64xf32>, vector<8x64xf32> -> vector<8x64xf32>
    %c0_96 = arith.constant 0 : index
    %c0_97 = arith.constant 0 : index
    %267 = vector.load %arg14[%c0_96, %c0_97] : memref<1x64xf32, #tpu.memory_space<vmem>>, vector<1x64xf32>
    %268 = vector.shape_cast %267 : vector<1x64xf32> to vector<64xf32>
    %269 = vector.shape_cast %268 : vector<64xf32> to vector<1x64xf32>
    %270 = vector.broadcast %269 : vector<1x64xf32> to vector<8x64xf32>
    %271 = arith.addf %266, %270 : vector<8x64xf32>
    %cst_98 = arith.constant 0.000000e+00 : f32
    %272 = vector.broadcast %cst_98 : f32 to vector<8x64xf32>
    %273 = arith.maximumf %271, %272 : vector<8x64xf32>
    %c0_99 = arith.constant 0 : index
    %c0_100 = arith.constant 0 : index
    %274 = vector.load %arg15[%c0_99, %c0_100] : memref<64x32xf32, #tpu.memory_space<vmem>>, vector<64x32xf32>
    %cst_101 = arith.constant dense<0.000000e+00> : vector<8x32xf32>
    %275 = tpu.matmul %273, %274, %cst_101 {dimension_numbers = #tpu.dot_dimension_numbers<[1], [0], [0], [1], [0, 0, 1, 1], [], []>} : vector<8x64xf32>, vector<64x32xf32>, vector<8x32xf32> -> vector<8x32xf32>
    %c0_102 = arith.constant 0 : index
    %c0_103 = arith.constant 0 : index
    %276 = vector.load %arg16[%c0_102, %c0_103] : memref<1x32xf32, #tpu.memory_space<vmem>>, vector<1x32xf32>
    %277 = vector.shape_cast %276 : vector<1x32xf32> to vector<32xf32>
    %278 = vector.shape_cast %277 : vector<32xf32> to vector<1x32xf32>
    %279 = vector.broadcast %278 : vector<1x32xf32> to vector<8x32xf32>
    %280 = arith.addf %275, %279 : vector<8x32xf32>
    %c0_104 = arith.constant 0 : index
    %c0_105 = arith.constant 0 : index
    %281 = vector.load %arg21[%c0_104, %c0_105] : memref<1x32xf32, #tpu.memory_space<vmem>>, vector<1x32xf32>
    %282 = vector.shape_cast %281 : vector<1x32xf32> to vector<32xf32>
    %c0_106 = arith.constant 0 : index
    %c0_107 = arith.constant 0 : index
    %283 = vector.load %arg22[%c0_106, %c0_107] : memref<1x32xf32, #tpu.memory_space<vmem>>, vector<1x32xf32>
    %284 = vector.shape_cast %283 : vector<1x32xf32> to vector<32xf32>
    %285 = arith.addf %264, %280 : vector<8x32xf32>
    %cst_108 = arith.constant dense<0.000000e+00> : vector<8xf32>
    %286 = vector.multi_reduction <add>, %285, %cst_108 [1] : vector<8x32xf32> to vector<8xf32>
    %287 = vector.shape_cast %286 : vector<8xf32> to vector<8x1xf32>
    %cst_109 = arith.constant 3.200000e+01 : f32
    %288 = vector.broadcast %cst_109 : f32 to vector<8x1xf32>
    %289 = arith.divf %287, %288 : vector<8x1xf32>
    %290 = vector.broadcast %289 : vector<8x1xf32> to vector<8x32xf32>
    %291 = arith.subf %285, %290 : vector<8x32xf32>
    %292 = arith.mulf %291, %291 : vector<8x32xf32>
    %cst_110 = arith.constant dense<0.000000e+00> : vector<8xf32>
    %293 = vector.multi_reduction <add>, %292, %cst_110 [1] : vector<8x32xf32> to vector<8xf32>
    %294 = vector.shape_cast %293 : vector<8xf32> to vector<8x1xf32>
    %cst_111 = arith.constant 3.200000e+01 : f32
    %295 = vector.broadcast %cst_111 : f32 to vector<8x1xf32>
    %296 = arith.divf %294, %295 : vector<8x1xf32>
    %cst_112 = arith.constant 9.99999974E-6 : f32
    %297 = vector.broadcast %cst_112 : f32 to vector<8x1xf32>
    %298 = arith.addf %296, %297 : vector<8x1xf32>
    %299 = math.rsqrt %298 : vector<8x1xf32>
    %300 = vector.broadcast %299 : vector<8x1xf32> to vector<8x32xf32>
    %301 = arith.mulf %291, %300 : vector<8x32xf32>
    %302 = vector.shape_cast %282 : vector<32xf32> to vector<1x32xf32>
    %303 = vector.broadcast %302 : vector<1x32xf32> to vector<8x32xf32>
    %304 = arith.mulf %301, %303 : vector<8x32xf32>
    %305 = vector.shape_cast %284 : vector<32xf32> to vector<1x32xf32>
    %306 = vector.broadcast %305 : vector<1x32xf32> to vector<8x32xf32>
    %307 = arith.addf %304, %306 : vector<8x32xf32>
    %c0_113 = arith.constant 0 : index
    %c0_114 = arith.constant 0 : index
    %c0_115 = arith.constant 0 : index
    %308 = vector.load %arg23[%c0_113, %c0_114, %c0_115] : memref<1x8x32xf32, #tpu.memory_space<vmem>>, vector<1x8x32xf32>
    %309 = vector.shape_cast %308 : vector<1x8x32xf32> to vector<8x32xf32>
    %310 = vector.shape_cast %307 : vector<8x32xf32> to vector<1x8x32xf32>
    tpu.vector_store %arg23[%c0_113, %c0_114, %c0_115], %310 {strides = array<i32>} : memref<1x8x32xf32, #tpu.memory_space<vmem>>, vector<1x8x32xf32>,
    return
  }
  func.func @transform_0(%arg0: i32) -> (i32, i32, i32) {
    %c0_i32 = arith.constant 0 : i32
    %c0_i32_0 = arith.constant 0 : i32
    %c0_i32_1 = arith.constant 0 : i32
    return %arg0, %c0_i32, %c0_i32_0 : i32, i32, i32
  }
  func.func @transform_1(%arg0: i32) -> (i32, i32, i32) {
    %c0_i32 = arith.constant 0 : i32
    %c0_i32_0 = arith.constant 0 : i32
    %c0_i32_1 = arith.constant 0 : i32
    return %arg0, %c0_i32, %c0_i32_0 : i32, i32, i32
  }
  func.func @transform_2(%arg0: i32) -> (i32, i32, i32) {
    %c0_i32 = arith.constant 0 : i32
    %c0_i32_0 = arith.constant 0 : i32
    %c0_i32_1 = arith.constant 0 : i32
    return %arg0, %c0_i32, %c0_i32_0 : i32, i32, i32
  }
  func.func @transform_3(%arg0: i32) -> (i32, i32, i32) {
    %c0_i32 = arith.constant 0 : i32
    %c0_i32_0 = arith.constant 0 : i32
    %c0_i32_1 = arith.constant 0 : i32
    return %arg0, %c0_i32, %c0_i32_0 : i32, i32, i32
  }
  func.func @transform_4(%arg0: i32) -> (i32, i32) {
    %c0_i32 = arith.constant 0 : i32
    %c0_i32_0 = arith.constant 0 : i32
    %c0_i32_1 = arith.constant 0 : i32
    return %c0_i32, %c0_i32_0 : i32, i32
  }
  func.func @transform_5(%arg0: i32) -> (i32, i32) {
    %c0_i32 = arith.constant 0 : i32
    %c0_i32_0 = arith.constant 0 : i32
    %c0_i32_1 = arith.constant 0 : i32
    return %c0_i32, %c0_i32_0 : i32, i32
  }
  func.func @transform_6(%arg0: i32) -> (i32, i32) {
    %c0_i32 = arith.constant 0 : i32
    %c0_i32_0 = arith.constant 0 : i32
    %c0_i32_1 = arith.constant 0 : i32
    return %c0_i32, %c0_i32_0 : i32, i32
  }
  func.func @transform_7(%arg0: i32) -> (i32, i32) {
    %c0_i32 = arith.constant 0 : i32
    %c0_i32_0 = arith.constant 0 : i32
    %c0_i32_1 = arith.constant 0 : i32
    return %c0_i32, %c0_i32_0 : i32, i32
  }
  func.func @transform_8(%arg0: i32) -> (i32, i32) {
    %c0_i32 = arith.constant 0 : i32
    %c0_i32_0 = arith.constant 0 : i32
    %c0_i32_1 = arith.constant 0 : i32
    return %c0_i32, %c0_i32_0 : i32, i32
  }
  func.func @transform_9(%arg0: i32) -> (i32, i32) {
    %c0_i32 = arith.constant 0 : i32
    %c0_i32_0 = arith.constant 0 : i32
    %c0_i32_1 = arith.constant 0 : i32
    return %c0_i32, %c0_i32_0 : i32, i32
  }
  func.func @transform_10(%arg0: i32) -> (i32, i32) {
    %c0_i32 = arith.constant 0 : i32
    %c0_i32_0 = arith.constant 0 : i32
    %c0_i32_1 = arith.constant 0 : i32
    return %c0_i32, %c0_i32_0 : i32, i32
  }
  func.func @transform_11(%arg0: i32) -> (i32, i32) {
    %c0_i32 = arith.constant 0 : i32
    %c0_i32_0 = arith.constant 0 : i32
    %c0_i32_1 = arith.constant 0 : i32
    return %c0_i32, %c0_i32_0 : i32, i32
  }
  func.func @transform_12(%arg0: i32) -> (i32, i32) {
    %c0_i32 = arith.constant 0 : i32
    %c0_i32_0 = arith.constant 0 : i32
    %c0_i32_1 = arith.constant 0 : i32
    return %c0_i32, %c0_i32_0 : i32, i32
  }
  func.func @transform_13(%arg0: i32) -> (i32, i32) {
    %c0_i32 = arith.constant 0 : i32
    %c0_i32_0 = arith.constant 0 : i32
    %c0_i32_1 = arith.constant 0 : i32
    return %c0_i32, %c0_i32_0 : i32, i32
  }
  func.func @transform_14(%arg0: i32) -> (i32, i32) {
    %c0_i32 = arith.constant 0 : i32
    %c0_i32_0 = arith.constant 0 : i32
    %c0_i32_1 = arith.constant 0 : i32
    return %c0_i32, %c0_i32_0 : i32, i32
  }
  func.func @transform_15(%arg0: i32) -> (i32, i32) {
    %c0_i32 = arith.constant 0 : i32
    %c0_i32_0 = arith.constant 0 : i32
    %c0_i32_1 = arith.constant 0 : i32
    return %c0_i32, %c0_i32_0 : i32, i32
  }
  func.func @transform_16(%arg0: i32) -> (i32, i32) {
    %c0_i32 = arith.constant 0 : i32
    %c0_i32_0 = arith.constant 0 : i32
    %c0_i32_1 = arith.constant 0 : i32
    return %c0_i32, %c0_i32_0 : i32, i32
  }
  func.func @transform_17(%arg0: i32) -> (i32, i32) {
    %c0_i32 = arith.constant 0 : i32
    %c0_i32_0 = arith.constant 0 : i32
    %c0_i32_1 = arith.constant 0 : i32
    return %c0_i32, %c0_i32_0 : i32, i32
  }
  func.func @transform_18(%arg0: i32) -> (i32, i32) {
    %c0_i32 = arith.constant 0 : i32
    %c0_i32_0 = arith.constant 0 : i32
    %c0_i32_1 = arith.constant 0 : i32
    return %c0_i32, %c0_i32_0 : i32, i32
  }
  func.func @transform_19(%arg0: i32) -> (i32, i32) {
    %c0_i32 = arith.constant 0 : i32
    %c0_i32_0 = arith.constant 0 : i32
    %c0_i32_1 = arith.constant 0 : i32
    return %c0_i32, %c0_i32_0 : i32, i32
  }
  func.func @transform_20(%arg0: i32) -> (i32, i32) {
    %c0_i32 = arith.constant 0 : i32
    %c0_i32_0 = arith.constant 0 : i32
    %c0_i32_1 = arith.constant 0 : i32
    return %c0_i32, %c0_i32_0 : i32, i32
  }
  func.func @transform_21(%arg0: i32) -> (i32, i32) {
    %c0_i32 = arith.constant 0 : i32
    %c0_i32_0 = arith.constant 0 : i32
    %c0_i32_1 = arith.constant 0 : i32
    return %c0_i32, %c0_i32_0 : i32, i32
  }
  func.func @transform_22(%arg0: i32) -> (i32, i32, i32) {
    %c0_i32 = arith.constant 0 : i32
    %c0_i32_0 = arith.constant 0 : i32
    %c0_i32_1 = arith.constant 0 : i32
    return %arg0, %c0_i32, %c0_i32_0 : i32, i32, i32
  }
}

</mosaic_0001>

<llo_original>
// kernel: tpu_custom_call.1
$region0: #{tpu_custom_call.1}
  #allocation0 [shape = 'u32[]', space=smem, size = 0x4, offset = 0x4, fixed_abs, tag = 'smem constant byte address 0x4 - core index']
  #allocation1 [shape = 'u32[72,128]{1,0:T(1,128)}', space=vmem, size = 0x9000, scoped, tag = 'internal scratch']
  %s0 = inlined_call_operand.hbm [shape: f32[2,8,32], index: 0, kind: input, shape index: {}]
  %s1 = inlined_call_operand.vmem [shape: f32[2,16,32], index: 1, kind: input, shape index: {}]
  %s2 = inlined_call_operand.hbm [shape: f32[2,8,32], index: 2, kind: input, shape index: {}]
  %s3 = inlined_call_operand.vmem [shape: f32[2,16,32], index: 3, kind: input, shape index: {}]
  %s4 = inlined_call_operand.vmem [shape: f32[32,96], index: 4, kind: input, shape index: {}]
  %s5 = inlined_call_operand.vmem [shape: f32[1,96], index: 5, kind: input, shape index: {}]
  %s6 = inlined_call_operand.hbm [shape: f32[32,32], index: 6, kind: input, shape index: {}]
  %s7 = inlined_call_operand.vmem [shape: f32[1,32], index: 7, kind: input, shape index: {}]
  %s8 = inlined_call_operand.hbm [shape: f32[32,96], index: 8, kind: input, shape index: {}]
  %s9 = inlined_call_operand.vmem [shape: f32[1,96], index: 9, kind: input, shape index: {}]
  %s10 = inlined_call_operand.hbm [shape: f32[32,32], index: 10, kind: input, shape index: {}]
  %s11 = inlined_call_operand.vmem [shape: f32[1,32], index: 11, kind: input, shape index: {}]
  %s12 = inlined_call_operand.hbm [shape: f32[32,64], index: 12, kind: input, shape index: {}]
  %s13 = inlined_call_operand.vmem [shape: f32[1,64], index: 13, kind: input, shape index: {}]
  %s14 = inlined_call_operand.vmem [shape: f32[64,32], index: 14, kind: input, shape index: {}]
  %s15 = inlined_call_operand.vmem [shape: f32[1,32], index: 15, kind: input, shape index: {}]
  %s16 = inlined_call_operand.vmem [shape: f32[1,32], index: 16, kind: input, shape index: {}]
  %s17 = inlined_call_operand.vmem [shape: f32[1,32], index: 17, kind: input, shape index: {}]
  %s18 = inlined_call_operand.vmem [shape: f32[1,32], index: 18, kind: input, shape index: {}]
  %s19 = inlined_call_operand.vmem [shape: f32[1,32], index: 19, kind: input, shape index: {}]
  %s20 = inlined_call_operand.vmem [shape: f32[1,32], index: 20, kind: input, shape index: {}]
  %s21 = inlined_call_operand.vmem [shape: f32[1,32], index: 21, kind: input, shape index: {}]
  %s22 = inlined_call_operand.hbm [shape: f32[2,8,32], index: 22, kind: output, shape index: {}]
  %s23 = sld [smem:[#allocation0]]
  $region145: #{tpu_custom_call.1} parent=0
    _
  %s25 = ssub.s32 1, %s23
  %s26 = scalar_select 0, %s25, %s23
  $region1: #{tpu_custom_call.1} parent=0
    #allocation2 [shape = 'u8[8192]{0}', space=vmem, size = 0x2000, scoped, tag = 'input window, operand 0']
    #allocation3 [shape = 's32[2]{0}', space=sflag, size = 0x8, scoped, tag = 'scoped memory for tpu_custom_call.1']
    #allocation4 [shape = 's32[2]{0}', space=sflag, size = 0x8, scoped, tag = 'scoped memory for tpu_custom_call.1']
    #allocation5 [shape = 'u8[8192]{0}', space=vmem, size = 0x2000, scoped, tag = 'input window, operand 2']
    #allocation6 [shape = 's32[2]{0}', space=sflag, size = 0x8, scoped, tag = 'scoped memory for tpu_custom_call.1']
    #allocation7 [shape = 'u8[16384]{0}', space=vmem, size = 0x4000, scoped, tag = 'input window, operand 6, single buffered']
    #allocation8 [shape = 'u8[16384]{0}', space=vmem, size = 0x4000, scoped, tag = 'input window, operand 8, single buffered']
    #allocation9 [shape = 's32[1]{0}', space=sflag, size = 0x4, scoped, tag = 'scoped memory for tpu_custom_call.1']
    #allocation10 [shape = 'u8[16384]{0}', space=vmem, size = 0x4000, scoped, tag = 'input window, operand 10, single buffered']
    #allocation11 [shape = 'u8[16384]{0}', space=vmem, size = 0x4000, scoped, tag = 'input window, operand 12, single buffered']
    #allocation12 [shape = 's32[1]{0}', space=sflag, size = 0x4, scoped, tag = 'scoped memory for tpu_custom_call.1']
    #allocation13 [shape = 'u8[8192]{0}', space=vmem, size = 0x2000, scoped, tag = 'output window, operand 0']
    %27 = vsyncpa [#allocation3], 0
    %s28 = scalar_lea.sflag [#allocation3], 1
    %29 = vsyncpa %s28, 0
    %30 = vsyncpa [#allocation6], 0
    %s31 = scalar_lea.sflag [#allocation6], 1
    %32 = vsyncpa %s31, 0
    %33 = vsyncpa [#allocation9], 0
    %34 = vsyncpa [#allocation12], 0
    %35 = vsyncpa [#allocation4], 0
    %s36 = scalar_lea.sflag [#allocation4], 1
    %37 = vsyncpa %s36, 0
    loop: start=0, step=1, limit=4
    $region2: #{tpu_custom_call.1} parent=1 // loop_pre_header
      _
    $region3: #{tpu_custom_call.1} parent=1 // loop_header
      %s39 = sphi 0, %s43
      %p40 = scmp.ge.s32.totalorder %s39, 4
      %s49 = sphi 0, %s51
      %s52 = sphi 0, %s49
      %s53 = sphi 0, %s52
      %s69 = sphi 0, %s53
      %s75 = sphi 0, %s77
      %s78 = sphi 0, %s75
      %s79 = sphi 0, %s78
      %s95 = sphi 0, %s79
      %s101 = sphi 0, %s103
      %s104 = sphi 0, %s101
      %s105 = sphi 0, %s104
      %s121 = sphi 0, %s105
      %s127 = sphi 0, %s129
      %s130 = sphi 0, %s127
      %s131 = sphi 0, %s130
      %s147 = sphi 0, %s131
      %s151 = sphi 0, %s151
      %s153 = sphi 0, %s151
      %s154 = sphi 0, %s153
      %s168 = sphi 0, %s154
      %s172 = sphi 0, %s172
      %s174 = sphi 0, %s172
      %s175 = sphi 0, %s174
      %s189 = sphi 0, %s175
      %s193 = sphi 0, %s193
      %s195 = sphi 0, %s193
      %s196 = sphi 0, %s195
      %s210 = sphi 0, %s196
      %s214 = sphi 0, %s214
      %s216 = sphi 0, %s214
      %s217 = sphi 0, %s216
      %s231 = sphi 0, %s217
      %s235 = sphi 0, %s235
      %s237 = sphi 0, %s235
      %s238 = sphi 0, %s237
      %s252 = sphi 0, %s238
      %s256 = sphi 0, %s256
      %s258 = sphi 0, %s256
      %s259 = sphi 0, %s258
      %s273 = sphi 0, %s259
      %s277 = sphi 0, %s277
      %s279 = sphi 0, %s277
      %s280 = sphi 0, %s279
      %s294 = sphi 0, %s280
      %s298 = sphi 0, %s298
      %s300 = sphi 0, %s298
      %s301 = sphi 0, %s300
      %s315 = sphi 0, %s301
      %s319 = sphi 0, %s319
      %s321 = sphi 0, %s319
      %s322 = sphi 0, %s321
      %s336 = sphi 0, %s322
      %s340 = sphi 0, %s340
      %s342 = sphi 0, %s340
      %s343 = sphi 0, %s342
      %s357 = sphi 0, %s343
      %s361 = sphi 0, %s361
      %s363 = sphi 0, %s361
      %s364 = sphi 0, %s363
      %s378 = sphi 0, %s364
      %s382 = sphi 0, %s382
      %s384 = sphi 0, %s382
      %s385 = sphi 0, %s384
      %s399 = sphi 0, %s385
      %s403 = sphi 0, %s403
      %s405 = sphi 0, %s403
      %s406 = sphi 0, %s405
      %s420 = sphi 0, %s406
      %s424 = sphi 0, %s424
      %s426 = sphi 0, %s424
      %s427 = sphi 0, %s426
      %s441 = sphi 0, %s427
      %s445 = sphi 0, %s445
      %s447 = sphi 0, %s445
      %s448 = sphi 0, %s447
      %s462 = sphi 0, %s448
      %s466 = sphi 0, %s466
      %s468 = sphi 0, %s466
      %s469 = sphi 0, %s468
      %s483 = sphi 0, %s469
      %s487 = sphi 0, %s487
      %s489 = sphi 0, %s487
      %s490 = sphi 0, %s489
      %s504 = sphi 0, %s490
      %s508 = sphi 0, %s508
      %s510 = sphi 0, %s508
      %s511 = sphi 0, %s510
      %s525 = sphi 0, %s511
      %s531 = sphi 0, %s533
      %s534 = sphi 0, %s531
      %s535 = sphi 0, %s534
      %s551 = sphi 0, %s535
    $region4: #{tpu_custom_call.1} parent=1 // loop_header_branch
      %42 = sbr.rel (%p40) target = $region8
    $region5: #{tpu_custom_call.1} parent=1 // loop_body
      %s44 = ssub.s32 %s39, 1
      %s45 = ssub.s32 %s39, 2
      %s46 = sadd.s32 %s39, 1
      %s47 = ssub.s32 %s39, %s46
      %p48 = scmp.eq.s32.totalorder %s47, 0
      %s50 = sadd.s32 %s49, 1
      %s51 = scalar_select %p48, %s49, %s50
      %p54 = pneg %p48
      %p55 = scmp.eq.s32.totalorder %s39, 1
      %p56 = por %p54, %p55
      %p57 = scmp.ne.s32.totalorder %s49, %s52
      %p58 = scmp.eq.s32.totalorder %s39, 0
      %p59 = por %p57, %p58
      %p60 = scmp.ne.s32.totalorder %s49, %s52
      %p61 = scmp.eq.s32.totalorder %s44, 1
      %p62 = por %p60, %p61
      %p63 = scmp.ne.s32.totalorder %s52, %s53
      %p64 = scmp.eq.s32.totalorder %s44, 0
      %p65 = por %p63, %p64
      %p66 = scmp.ne.s32.totalorder %s52, %s53
      %p67 = scmp.eq.s32.totalorder %s45, 1
      %p68 = por %p66, %p67
      %p70 = scmp.ne.s32.totalorder %s53, %s69
      %p71 = scmp.eq.s32.totalorder %s45, 0
      %p72 = por %p70, %p71
      %s73 = ssub.s32 %s39, %s46
      %p74 = scmp.eq.s32.totalorder %s73, 0
      %s76 = sadd.s32 %s75, 1
      %s77 = scalar_select %p74, %s75, %s76
      %p80 = pneg %p74
      %p81 = scmp.eq.s32.totalorder %s39, 1
      %p82 = por %p80, %p81
      %p83 = scmp.ne.s32.totalorder %s75, %s78
      %p84 = scmp.eq.s32.totalorder %s39, 0
      %p85 = por %p83, %p84
      %p86 = scmp.ne.s32.totalorder %s75, %s78
      %p87 = scmp.eq.s32.totalorder %s44, 1
      %p88 = por %p86, %p87
      %p89 = scmp.ne.s32.totalorder %s78, %s79
      %p90 = scmp.eq.s32.totalorder %s44, 0
      %p91 = por %p89, %p90
      %p92 = scmp.ne.s32.totalorder %s78, %s79
      %p93 = scmp.eq.s32.totalorder %s45, 1
      %p94 = por %p92, %p93
      %p96 = scmp.ne.s32.totalorder %s79, %s95
      %p97 = scmp.eq.s32.totalorder %s45, 0
      %p98 = por %p96, %p97
      %s99 = ssub.s32 %s39, %s46
      %p100 = scmp.eq.s32.totalorder %s99, 0
      %s102 = sadd.s32 %s101, 1
      %s103 = scalar_select %p100, %s101, %s102
      %p106 = pneg %p100
      %p107 = scmp.eq.s32.totalorder %s39, 1
      %p108 = por %p106, %p107
      %p109 = scmp.ne.s32.totalorder %s101, %s104
      %p110 = scmp.eq.s32.totalorder %s39, 0
      %p111 = por %p109, %p110
      %p112 = scmp.ne.s32.totalorder %s101, %s104
      %p113 = scmp.eq.s32.totalorder %s44, 1
      %p114 = por %p112, %p113
      %p115 = scmp.ne.s32.totalorder %s104, %s105
      %p116 = scmp.eq.s32.totalorder %s44, 0
      %p117 = por %p115, %p116
      %p118 = scmp.ne.s32.totalorder %s104, %s105
      %p119 = scmp.eq.s32.totalorder %s45, 1
      %p120 = por %p118, %p119
      %p122 = scmp.ne.s32.totalorder %s105, %s121
      %p123 = scmp.eq.s32.totalorder %s45, 0
      %p124 = por %p122, %p123
      %s125 = ssub.s32 %s39, %s46
      %p126 = scmp.eq.s32.totalorder %s125, 0
      %s128 = sadd.s32 %s127, 1
      %s129 = scalar_select %p126, %s127, %s128
      %p132 = pneg %p126
      %p133 = scmp.eq.s32.totalorder %s39, 1
      %p134 = por %p132, %p133
      %p135 = scmp.ne.s32.totalorder %s127, %s130
      %p136 = scmp.eq.s32.totalorder %s39, 0
      %p137 = por %p135, %p136
      %p138 = scmp.ne.s32.totalorder %s127, %s130
      %p139 = scmp.eq.s32.totalorder %s44, 1
      %p140 = por %p138, %p139
      %p141 = scmp.ne.s32.totalorder %s130, %s131
      %p142 = scmp.eq.s32.totalorder %s44, 0
      %p143 = por %p141, %p142
      %p144 = scmp.ne.s32.totalorder %s130, %s131
      %p145 = scmp.eq.s32.totalorder %s45, 1
      %p146 = por %p144, %p145
      %p148 = scmp.ne.s32.totalorder %s131, %s147
      %p149 = scmp.eq.s32.totalorder %s45, 0
      %p150 = por %p148, %p149
      %s152 = sadd.s32 %s151, 1
      %p155 = scmp.eq.s32.totalorder %s39, 1
      %p156 = scmp.ne.s32.totalorder %s151, %s153
      %p157 = scmp.eq.s32.totalorder %s39, 0
      %p158 = por %p156, %p157
      %p159 = scmp.ne.s32.totalorder %s151, %s153
      %p160 = scmp.eq.s32.totalorder %s44, 1
      %p161 = por %p159, %p160
      %p162 = scmp.ne.s32.totalorder %s153, %s154
      %p163 = scmp.eq.s32.totalorder %s44, 0
      %p164 = por %p162, %p163
      %p165 = scmp.ne.s32.totalorder %s153, %s154
      %p166 = scmp.eq.s32.totalorder %s45, 1
      %p167 = por %p165, %p166
      %p169 = scmp.ne.s32.totalorder %s154, %s168
      %p170 = scmp.eq.s32.totalorder %s45, 0
      %p171 = por %p169, %p170
      %s173 = sadd.s32 %s172, 1
      %p176 = scmp.eq.s32.totalorder %s39, 1
      %p177 = scmp.ne.s32.totalorder %s172, %s174
      %p178 = scmp.eq.s32.totalorder %s39, 0
      %p179 = por %p177, %p178
      %p180 = scmp.ne.s32.totalorder %s172, %s174
      %p181 = scmp.eq.s32.totalorder %s44, 1
      %p182 = por %p180, %p181
      %p183 = scmp.ne.s32.totalorder %s174, %s175
      %p184 = scmp.eq.s32.totalorder %s44, 0
      %p185 = por %p183, %p184
      %p186 = scmp.ne.s32.totalorder %s174, %s175
      %p187 = scmp.eq.s32.totalorder %s45, 1
      %p188 = por %p186, %p187
      %p190 = scmp.ne.s32.totalorder %s175, %s189
      %p191 = scmp.eq.s32.totalorder %s45, 0
      %p192 = por %p190, %p191
      %s194 = sadd.s32 %s193, 1
      %p197 = scmp.eq.s32.totalorder %s39, 1
      %p198 = scmp.ne.s32.totalorder %s193, %s195
      %p199 = scmp.eq.s32.totalorder %s39, 0
      %p200 = por %p198, %p199
      %p201 = scmp.ne.s32.totalorder %s193, %s195
      %p202 = scmp.eq.s32.totalorder %s44, 1
      %p203 = por %p201, %p202
      %p204 = scmp.ne.s32.totalorder %s195, %s196
      %p205 = scmp.eq.s32.totalorder %s44, 0
      %p206 = por %p204, %p205
      %p207 = scmp.ne.s32.totalorder %s195, %s196
      %p208 = scmp.eq.s32.totalorder %s45, 1
      %p209 = por %p207, %p208
      %p211 = scmp.ne.s32.totalorder %s196, %s210
      %p212 = scmp.eq.s32.totalorder %s45, 0
      %p213 = por %p211, %p212
      %s215 = sadd.s32 %s214, 1
      %p218 = scmp.eq.s32.totalorder %s39, 1
      %p219 = scmp.ne.s32.totalorder %s214, %s216
      %p220 = scmp.eq.s32.totalorder %s39, 0
      %p221 = por %p219, %p220
      %p222 = scmp.ne.s32.totalorder %s214, %s216
      %p223 = scmp.eq.s32.totalorder %s44, 1
      %p224 = por %p222, %p223
      %p225 = scmp.ne.s32.totalorder %s216, %s217
      %p226 = scmp.eq.s32.totalorder %s44, 0
      %p227 = por %p225, %p226
      %p228 = scmp.ne.s32.totalorder %s216, %s217
      %p229 = scmp.eq.s32.totalorder %s45, 1
      %p230 = por %p228, %p229
      %p232 = scmp.ne.s32.totalorder %s217, %s231
      %p233 = scmp.eq.s32.totalorder %s45, 0
      %p234 = por %p232, %p233
      %s236 = sadd.s32 %s235, 1
      %p239 = scmp.eq.s32.totalorder %s39, 1
      %p240 = scmp.ne.s32.totalorder %s235, %s237
      %p241 = scmp.eq.s32.totalorder %s39, 0
      %p242 = por %p240, %p241
      %p243 = scmp.ne.s32.totalorder %s235, %s237
      %p244 = scmp.eq.s32.totalorder %s44, 1
      %p245 = por %p243, %p244
      %p246 = scmp.ne.s32.totalorder %s237, %s238
      %p247 = scmp.eq.s32.totalorder %s44, 0
      %p248 = por %p246, %p247
      %p249 = scmp.ne.s32.totalorder %s237, %s238
      %p250 = scmp.eq.s32.totalorder %s45, 1
      %p251 = por %p249, %p250
      %p253 = scmp.ne.s32.totalorder %s238, %s252
      %p254 = scmp.eq.s32.totalorder %s45, 0
      %p255 = por %p253, %p254
      %s257 = sadd.s32 %s256, 1
      %p260 = scmp.eq.s32.totalorder %s39, 1
      %p261 = scmp.ne.s32.totalorder %s256, %s258
      %p262 = scmp.eq.s32.totalorder %s39, 0
      %p263 = por %p261, %p262
      %p264 = scmp.ne.s32.totalorder %s256, %s258
      %p265 = scmp.eq.s32.totalorder %s44, 1
      %p266 = por %p264, %p265
      %p267 = scmp.ne.s32.totalorder %s258, %s259
      %p268 = scmp.eq.s32.totalorder %s44, 0
      %p269 = por %p267, %p268
      %p270 = scmp.ne.s32.totalorder %s258, %s259
      %p271 = scmp.eq.s32.totalorder %s45, 1
      %p272 = por %p270, %p271
      %p274 = scmp.ne.s32.totalorder %s259, %s273
      %p275 = scmp.eq.s32.totalorder %s45, 0
      %p276 = por %p274, %p275
      %s278 = sadd.s32 %s277, 1
      %p281 = scmp.eq.s32.totalorder %s39, 1
      %p282 = scmp.ne.s32.totalorder %s277, %s279
      %p283 = scmp.eq.s32.totalorder %s39, 0
      %p284 = por %p282, %p283
      %p285 = scmp.ne.s32.totalorder %s277, %s279
      %p286 = scmp.eq.s32.totalorder %s44, 1
      %p287 = por %p285, %p286
      %p288 = scmp.ne.s32.totalorder %s279, %s280
      %p289 = scmp.eq.s32.totalorder %s44, 0
      %p290 = por %p288, %p289
      %p291 = scmp.ne.s32.totalorder %s279, %s280
      %p292 = scmp.eq.s32.totalorder %s45, 1
      %p293 = por %p291, %p292
      %p295 = scmp.ne.s32.totalorder %s280, %s294
      %p296 = scmp.eq.s32.totalorder %s45, 0
      %p297 = por %p295, %p296
      %s299 = sadd.s32 %s298, 1
      %p302 = scmp.eq.s32.totalorder %s39, 1
      %p303 = scmp.ne.s32.totalorder %s298, %s300
      %p304 = scmp.eq.s32.totalorder %s39, 0
      %p305 = por %p303, %p304
      %p306 = scmp.ne.s32.totalorder %s298, %s300
      %p307 = scmp.eq.s32.totalorder %s44, 1
      %p308 = por %p306, %p307
      %p309 = scmp.ne.s32.totalorder %s300, %s301
      %p310 = scmp.eq.s32.totalorder %s44, 0
      %p311 = por %p309, %p310
      %p312 = scmp.ne.s32.totalorder %s300, %s301
      %p313 = scmp.eq.s32.totalorder %s45, 1
      %p314 = por %p312, %p313
      %p316 = scmp.ne.s32.totalorder %s301, %s315
      %p317 = scmp.eq.s32.totalorder %s45, 0
      %p318 = por %p316, %p317
      %s320 = sadd.s32 %s319, 1
      %p323 = scmp.eq.s32.totalorder %s39, 1
      %p324 = scmp.ne.s32.totalorder %s319, %s321
      %p325 = scmp.eq.s32.totalorder %s39, 0
      %p326 = por %p324, %p325
      %p327 = scmp.ne.s32.totalorder %s319, %s321
      %p328 = scmp.eq.s32.totalorder %s44, 1
      %p329 = por %p327, %p328
      %p330 = scmp.ne.s32.totalorder %s321, %s322
      %p331 = scmp.eq.s32.totalorder %s44, 0
      %p332 = por %p330, %p331
      %p333 = scmp.ne.s32.totalorder %s321, %s322
      %p334 = scmp.eq.s32.totalorder %s45, 1
      %p335 = por %p333, %p334
      %p337 = scmp.ne.s32.totalorder %s322, %s336
      %p338 = scmp.eq.s32.totalorder %s45, 0
      %p339 = por %p337, %p338
      %s341 = sadd.s32 %s340, 1
      %p344 = scmp.eq.s32.totalorder %s39, 1
      %p345 = scmp.ne.s32.totalorder %s340, %s342
      %p346 = scmp.eq.s32.totalorder %s39, 0
      %p347 = por %p345, %p346
      %p348 = scmp.ne.s32.totalorder %s340, %s342
      %p349 = scmp.eq.s32.totalorder %s44, 1
      %p350 = por %p348, %p349
      %p351 = scmp.ne.s32.totalorder %s342, %s343
      %p352 = scmp.eq.s32.totalorder %s44, 0
      %p353 = por %p351, %p352
      %p354 = scmp.ne.s32.totalorder %s342, %s343
      %p355 = scmp.eq.s32.totalorder %s45, 1
      %p356 = por %p354, %p355
      %p358 = scmp.ne.s32.totalorder %s343, %s357
      %p359 = scmp.eq.s32.totalorder %s45, 0
      %p360 = por %p358, %p359
      %s362 = sadd.s32 %s361, 1
      %p365 = scmp.eq.s32.totalorder %s39, 1
      %p366 = scmp.ne.s32.totalorder %s361, %s363
      %p367 = scmp.eq.s32.totalorder %s39, 0
      %p368 = por %p366, %p367
      %p369 = scmp.ne.s32.totalorder %s361, %s363
      %p370 = scmp.eq.s32.totalorder %s44, 1
      %p371 = por %p369, %p370
      %p372 = scmp.ne.s32.totalorder %s363, %s364
      %p373 = scmp.eq.s32.totalorder %s44, 0
      %p374 = por %p372, %p373
      %p375 = scmp.ne.s32.totalorder %s363, %s364
      %p376 = scmp.eq.s32.totalorder %s45, 1
      %p377 = por %p375, %p376
      %p379 = scmp.ne.s32.totalorder %s364, %s378
      %p380 = scmp.eq.s32.totalorder %s45, 0
      %p381 = por %p379, %p380
      %s383 = sadd.s32 %s382, 1
      %p386 = scmp.eq.s32.totalorder %s39, 1
      %p387 = scmp.ne.s32.totalorder %s382, %s384
      %p388 = scmp.eq.s32.totalorder %s39, 0
      %p389 = por %p387, %p388
      %p390 = scmp.ne.s32.totalorder %s382, %s384
      %p391 = scmp.eq.s32.totalorder %s44, 1
      %p392 = por %p390, %p391
      %p393 = scmp.ne.s32.totalorder %s384, %s385
      %p394 = scmp.eq.s32.totalorder %s44, 0
      %p395 = por %p393, %p394
      %p396 = scmp.ne.s32.totalorder %s384, %s385
      %p397 = scmp.eq.s32.totalorder %s45, 1
      %p398 = por %p396, %p397
      %p400 = scmp.ne.s32.totalorder %s385, %s399
      %p401 = scmp.eq.s32.totalorder %s45, 0
      %p402 = por %p400, %p401
      %s404 = sadd.s32 %s403, 1
      %p407 = scmp.eq.s32.totalorder %s39, 1
      %p408 = scmp.ne.s32.totalorder %s403, %s405
      %p409 = scmp.eq.s32.totalorder %s39, 0
      %p410 = por %p408, %p409
      %p411 = scmp.ne.s32.totalorder %s403, %s405
      %p412 = scmp.eq.s32.totalorder %s44, 1
      %p413 = por %p411, %p412
      %p414 = scmp.ne.s32.totalorder %s405, %s406
      %p415 = scmp.eq.s32.totalorder %s44, 0
      %p416 = por %p414, %p415
      %p417 = scmp.ne.s32.totalorder %s405, %s406
      %p418 = scmp.eq.s32.totalorder %s45, 1
      %p419 = por %p417, %p418
      %p421 = scmp.ne.s32.totalorder %s406, %s420
      %p422 = scmp.eq.s32.totalorder %s45, 0
      %p423 = por %p421, %p422
      %s425 = sadd.s32 %s424, 1
      %p428 = scmp.eq.s32.totalorder %s39, 1
      %p429 = scmp.ne.s32.totalorder %s424, %s426
      %p430 = scmp.eq.s32.totalorder %s39, 0
      %p431 = por %p429, %p430
      %p432 = scmp.ne.s32.totalorder %s424, %s426
      %p433 = scmp.eq.s32.totalorder %s44, 1
      %p434 = por %p432, %p433
      %p435 = scmp.ne.s32.totalorder %s426, %s427
      %p436 = scmp.eq.s32.totalorder %s44, 0
      %p437 = por %p435, %p436
      %p438 = scmp.ne.s32.totalorder %s426, %s427
      %p439 = scmp.eq.s32.totalorder %s45, 1
      %p440 = por %p438, %p439
      %p442 = scmp.ne.s32.totalorder %s427, %s441
      %p443 = scmp.eq.s32.totalorder %s45, 0
      %p444 = por %p442, %p443
      %s446 = sadd.s32 %s445, 1
      %p449 = scmp.eq.s32.totalorder %s39, 1
      %p450 = scmp.ne.s32.totalorder %s445, %s447
      %p451 = scmp.eq.s32.totalorder %s39, 0
      %p452 = por %p450, %p451
      %p453 = scmp.ne.s32.totalorder %s445, %s447
      %p454 = scmp.eq.s32.totalorder %s44, 1
      %p455 = por %p453, %p454
      %p456 = scmp.ne.s32.totalorder %s447, %s448
      %p457 = scmp.eq.s32.totalorder %s44, 0
      %p458 = por %p456, %p457
      %p459 = scmp.ne.s32.totalorder %s447, %s448
      %p460 = scmp.eq.s32.totalorder %s45, 1
      %p461 = por %p459, %p460
      %p463 = scmp.ne.s32.totalorder %s448, %s462
      %p464 = scmp.eq.s32.totalorder %s45, 0
      %p465 = por %p463, %p464
      %s467 = sadd.s32 %s466, 1
      %p470 = scmp.eq.s32.totalorder %s39, 1
      %p471 = scmp.ne.s32.totalorder %s466, %s468
      %p472 = scmp.eq.s32.totalorder %s39, 0
      %p473 = por %p471, %p472
      %p474 = scmp.ne.s32.totalorder %s466, %s468
      %p475 = scmp.eq.s32.totalorder %s44, 1
      %p476 = por %p474, %p475
      %p477 = scmp.ne.s32.totalorder %s468, %s469
      %p478 = scmp.eq.s32.totalorder %s44, 0
      %p479 = por %p477, %p478
      %p480 = scmp.ne.s32.totalorder %s468, %s469
      %p481 = scmp.eq.s32.totalorder %s45, 1
      %p482 = por %p480, %p481
      %p484 = scmp.ne.s32.totalorder %s469, %s483
      %p485 = scmp.eq.s32.totalorder %s45, 0
      %p486 = por %p484, %p485
      %s488 = sadd.s32 %s487, 1
      %p491 = scmp.eq.s32.totalorder %s39, 1
      %p492 = scmp.ne.s32.totalorder %s487, %s489
      %p493 = scmp.eq.s32.totalorder %s39, 0
      %p494 = por %p492, %p493
      %p495 = scmp.ne.s32.totalorder %s487, %s489
      %p496 = scmp.eq.s32.totalorder %s44, 1
      %p497 = por %p495, %p496
      %p498 = scmp.ne.s32.totalorder %s489, %s490
      %p499 = scmp.eq.s32.totalorder %s44, 0
      %p500 = por %p498, %p499
      %p501 = scmp.ne.s32.totalorder %s489, %s490
      %p502 = scmp.eq.s32.totalorder %s45, 1
      %p503 = por %p501, %p502
      %p505 = scmp.ne.s32.totalorder %s490, %s504
      %p506 = scmp.eq.s32.totalorder %s45, 0
      %p507 = por %p505, %p506
      %s509 = sadd.s32 %s508, 1
      %p512 = scmp.eq.s32.totalorder %s39, 1
      %p513 = scmp.ne.s32.totalorder %s508, %s510
      %p514 = scmp.eq.s32.totalorder %s39, 0
      %p515 = por %p513, %p514
      %p516 = scmp.ne.s32.totalorder %s508, %s510
      %p517 = scmp.eq.s32.totalorder %s44, 1
      %p518 = por %p516, %p517
      %p519 = scmp.ne.s32.totalorder %s510, %s511
      %p520 = scmp.eq.s32.totalorder %s44, 0
      %p521 = por %p519, %p520
      %p522 = scmp.ne.s32.totalorder %s510, %s511
      %p523 = scmp.eq.s32.totalorder %s45, 1
      %p524 = por %p522, %p523
      %p526 = scmp.ne.s32.totalorder %s511, %s525
      %p527 = scmp.eq.s32.totalorder %s45, 0
      %p528 = por %p526, %p527
      %s529 = ssub.s32 %s39, %s46
      %p530 = scmp.eq.s32.totalorder %s529, 0
      %s532 = sadd.s32 %s531, 1
      %s533 = scalar_select %p530, %s531, %s532
      %p536 = pneg %p530
      %p537 = scmp.eq.s32.totalorder %s39, 1
      %p538 = por %p536, %p537
      %p539 = scmp.ne.s32.totalorder %s531, %s534
      %p540 = scmp.eq.s32.totalorder %s39, 0
      %p541 = por %p539, %p540
      %p542 = scmp.ne.s32.totalorder %s531, %s534
      %p543 = scmp.eq.s32.totalorder %s44, 1
      %p544 = por %p542, %p543
      %p545 = scmp.ne.s32.totalorder %s534, %s535
      %p546 = scmp.eq.s32.totalorder %s44, 0
      %p547 = por %p545, %p546
      %p548 = scmp.ne.s32.totalorder %s534, %s535
      %p549 = scmp.eq.s32.totalorder %s45, 1
      %p550 = por %p548, %p549
      %p552 = scmp.ne.s32.totalorder %s535, %s551
      %p553 = scmp.eq.s32.totalorder %s45, 0
      %p554 = por %p552, %p553
      %p555 = scmp.le.s32.totalorder 1, %s39
      %p556 = scmp.lt.s32.totalorder %s39, 3
      %p557 = pnand %p555, %p556
      %p558 = pneg %p557
      // Predicated region
      $region9: #{tpu_custom_call.1} parent=5 // pred_check
        _
      $region10: #{tpu_custom_call.1} parent=5 // pred_check_branch
        %560 = sbr.rel (%p557) target = $region12
      $region11: #{tpu_custom_call.1} parent=5 // pred_region
        %s561 = ssub.s32 %s39, 1
        // Predicated region
        $region13: #{tpu_custom_call.1} parent=11 // pred_check
          %p562 = pneg %p164
        $region14: #{tpu_custom_call.1} parent=11 // pred_check_branch
          %564 = sbr.rel (%p562) target = $region16
        $region15: #{tpu_custom_call.1} parent=11 // pred_region
          _
        $region16: #{tpu_custom_call.1} parent=11 // pred_fallthru
          _
        // Predicated region
        $region17: #{tpu_custom_call.1} parent=11 // pred_check
          %p565 = pneg %p185
        $region18: #{tpu_custom_call.1} parent=11 // pred_check_branch
          %567 = sbr.rel (%p565) target = $region20
        $region19: #{tpu_custom_call.1} parent=11 // pred_region
          _
        $region20: #{tpu_custom_call.1} parent=11 // pred_fallthru
          _
        // Predicated region
        $region21: #{tpu_custom_call.1} parent=11 // pred_check
          %p568 = pneg %p206
        $region22: #{tpu_custom_call.1} parent=11 // pred_check_branch
          %570 = sbr.rel (%p568) target = $region24
        $region23: #{tpu_custom_call.1} parent=11 // pred_region
          %572 = vsyncadd [#allocation6], 0
          %s573 = sshll.u32 %s6, 4
          %s574 = int_to_ptr.hbm [resolvable:$true] %s573
          %s575 = sshll.u32 [#allocation7], 4
          %s576 = int_to_ptr.vmem [resolvable:$true] %s575
          %581 = dma.hbm_to_vmem [thread:$0]  %s574, 512, %s576, [#allocation6], 128, 128, 8
        $region24: #{tpu_custom_call.1} parent=11 // pred_fallthru
          _
        // Predicated region
        $region25: #{tpu_custom_call.1} parent=11 // pred_check
          %p582 = pneg %p227
        $region26: #{tpu_custom_call.1} parent=11 // pred_check_branch
          %584 = sbr.rel (%p582) target = $region28
        $region27: #{tpu_custom_call.1} parent=11 // pred_region
          _
        $region28: #{tpu_custom_call.1} parent=11 // pred_fallthru
          _
        // Predicated region
        $region29: #{tpu_custom_call.1} parent=11 // pred_check
          %p585 = pneg %p248
        $region30: #{tpu_custom_call.1} parent=11 // pred_check_branch
          %587 = sbr.rel (%p585) target = $region32
        $region31: #{tpu_custom_call.1} parent=11 // pred_region
          %589 = vsyncadd [#allocation9], 0
          %s590 = sshll.u32 %s8, 4
          %s591 = int_to_ptr.hbm [resolvable:$true] %s590
          %s592 = sshll.u32 [#allocation8], 4
          %s593 = int_to_ptr.vmem [resolvable:$true] %s592
          %598 = dma.hbm_to_vmem [thread:$0]  %s591, 512, %s593, [#allocation9], 128, 128, 8
        $region32: #{tpu_custom_call.1} parent=11 // pred_fallthru
          _
        // Predicated region
        $region33: #{tpu_custom_call.1} parent=11 // pred_check
          %p599 = pneg %p269
        $region34: #{tpu_custom_call.1} parent=11 // pred_check_branch
          %601 = sbr.rel (%p599) target = $region36
        $region35: #{tpu_custom_call.1} parent=11 // pred_region
          _
        $region36: #{tpu_custom_call.1} parent=11 // pred_fallthru
          _
        // Predicated region
        $region37: #{tpu_custom_call.1} parent=11 // pred_check
          %p602 = pneg %p290
        $region38: #{tpu_custom_call.1} parent=11 // pred_check_branch
          %604 = sbr.rel (%p602) target = $region40
        $region39: #{tpu_custom_call.1} parent=11 // pred_region
          %606 = vsyncadd [#allocation9], 0
          %s607 = sshll.u32 %s10, 4
          %s608 = int_to_ptr.hbm [resolvable:$true] %s607
          %s609 = sshll.u32 [#allocation10], 4
          %s610 = int_to_ptr.vmem [resolvable:$true] %s609
          %615 = dma.hbm_to_vmem [thread:$0]  %s608, 512, %s610, [#allocation9], 128, 128, 8
        $region40: #{tpu_custom_call.1} parent=11 // pred_fallthru
          _
        // Predicated region
        $region41: #{tpu_custom_call.1} parent=11 // pred_check
          %p616 = pneg %p311
        $region42: #{tpu_custom_call.1} parent=11 // pred_check_branch
          %618 = sbr.rel (%p616) target = $region44
        $region43: #{tpu_custom_call.1} parent=11 // pred_region
          _
        $region44: #{tpu_custom_call.1} parent=11 // pred_fallthru
          _
        // Predicated region
        $region45: #{tpu_custom_call.1} parent=11 // pred_check
          %p619 = pneg %p332
        $region46: #{tpu_custom_call.1} parent=11 // pred_check_branch
          %621 = sbr.rel (%p619) target = $region48
        $region47: #{tpu_custom_call.1} parent=11 // pred_region
          %623 = vsyncadd [#allocation12], 0
          %s624 = sshll.u32 %s12, 4
          %s625 = int_to_ptr.hbm [resolvable:$true] %s624
          %s626 = sshll.u32 [#allocation11], 4
          %s627 = int_to_ptr.vmem [resolvable:$true] %s626
          %632 = dma.hbm_to_vmem [thread:$0]  %s625, 512, %s627, [#allocation12], 128, 128, 8
        $region48: #{tpu_custom_call.1} parent=11 // pred_fallthru
          _
        // Predicated region
        $region49: #{tpu_custom_call.1} parent=11 // pred_check
          %p633 = pneg %p353
        $region50: #{tpu_custom_call.1} parent=11 // pred_check_branch
          %635 = sbr.rel (%p633) target = $region52
        $region51: #{tpu_custom_call.1} parent=11 // pred_region
          _
        $region52: #{tpu_custom_call.1} parent=11 // pred_fallthru
          _
        // Predicated region
        $region53: #{tpu_custom_call.1} parent=11 // pred_check
          %p636 = pneg %p374
        $region54: #{tpu_custom_call.1} parent=11 // pred_check_branch
          %638 = sbr.rel (%p636) target = $region56
        $region55: #{tpu_custom_call.1} parent=11 // pred_region
          _
        $region56: #{tpu_custom_call.1} parent=11 // pred_fallthru
          _
        // Predicated region
        $region57: #{tpu_custom_call.1} parent=11 // pred_check
          %p639 = pneg %p395
        $region58: #{tpu_custom_call.1} parent=11 // pred_check_branch
          %641 = sbr.rel (%p639) target = $region60
        $region59: #{tpu_custom_call.1} parent=11 // pred_region
          _
        $region60: #{tpu_custom_call.1} parent=11 // pred_fallthru
          _
        // Predicated region
        $region61: #{tpu_custom_call.1} parent=11 // pred_check
          %p642 = pneg %p416
        $region62: #{tpu_custom_call.1} parent=11 // pred_check_branch
          %644 = sbr.rel (%p642) target = $region64
        $region63: #{tpu_custom_call.1} parent=11 // pred_region
          _
        $region64: #{tpu_custom_call.1} parent=11 // pred_fallthru
          _
        // Predicated region
        $region65: #{tpu_custom_call.1} parent=11 // pred_check
          %p645 = pneg %p437
        $region66: #{tpu_custom_call.1} parent=11 // pred_check_branch
          %647 = sbr.rel (%p645) target = $region68
        $region67: #{tpu_custom_call.1} parent=11 // pred_region
          _
        $region68: #{tpu_custom_call.1} parent=11 // pred_fallthru
          _
        // Predicated region
        $region69: #{tpu_custom_call.1} parent=11 // pred_check
          %p648 = pneg %p458
        $region70: #{tpu_custom_call.1} parent=11 // pred_check_branch
          %650 = sbr.rel (%p648) target = $region72
        $region71: #{tpu_custom_call.1} parent=11 // pred_region
          _
        $region72: #{tpu_custom_call.1} parent=11 // pred_fallthru
          _
        // Predicated region
        $region73: #{tpu_custom_call.1} parent=11 // pred_check
          %p651 = pneg %p479
        $region74: #{tpu_custom_call.1} parent=11 // pred_check_branch
          %653 = sbr.rel (%p651) target = $region76
        $region75: #{tpu_custom_call.1} parent=11 // pred_region
          _
        $region76: #{tpu_custom_call.1} parent=11 // pred_fallthru
          _
        // Predicated region
        $region77: #{tpu_custom_call.1} parent=11 // pred_check
          %p654 = pneg %p500
        $region78: #{tpu_custom_call.1} parent=11 // pred_check_branch
          %656 = sbr.rel (%p654) target = $region80
        $region79: #{tpu_custom_call.1} parent=11 // pred_region
          _
        $region80: #{tpu_custom_call.1} parent=11 // pred_fallthru
          _
        // Predicated region
        $region81: #{tpu_custom_call.1} parent=11 // pred_check
          %p657 = pneg %p521
        $region82: #{tpu_custom_call.1} parent=11 // pred_check_branch
          %659 = sbr.rel (%p657) target = $region84
        $region83: #{tpu_custom_call.1} parent=11 // pred_region
          _
        $region84: #{tpu_custom_call.1} parent=11 // pred_fallthru
          _
      $region12: #{tpu_custom_call.1} parent=5 // pred_fallthru
        _
      %p660 = scmp.lt.s32.totalorder %s39, 2
      // Predicated region
      $region85: #{tpu_custom_call.1} parent=5 // pred_check
        %p661 = pneg %p660
      $region86: #{tpu_custom_call.1} parent=5 // pred_check_branch
        %663 = sbr.rel (%p661) target = $region88
      $region87: #{tpu_custom_call.1} parent=5 // pred_region
        // Predicated region
        $region89: #{tpu_custom_call.1} parent=87 // pred_check
          %p664 = pneg %p59
        $region90: #{tpu_custom_call.1} parent=87 // pred_check_branch
          %666 = sbr.rel (%p664) target = $region92
        $region91: #{tpu_custom_call.1} parent=87 // pred_region
          %s667 = sand.u32 %s49, 1
          %s668 = scalar_lea.sflag [#allocation3], %s667
          %s669 = sand.u32 %s49, 1
          %s670 = smul.addr %s669, 8
          %s671 = scalar_lea.vmem [#allocation2], %s670
          %673 = vsyncadd %s668, 0
          %s674 = smul.addr %s39, 8
          %s675 = scalar_lea.hbm %s0, %s674
          %s677 = sshll.u32 %s675, 4
          %s678 = int_to_ptr.hbm [resolvable:$true] %s677
          %s679 = sshll.u32 %s671, 4
          %s680 = int_to_ptr.vmem [resolvable:$true] %s679
          %682 = dma.hbm_to_vmem [thread:$0]  %s678, 128, %s680, %s668
        $region92: #{tpu_custom_call.1} parent=87 // pred_fallthru
          _
        // Predicated region
        $region93: #{tpu_custom_call.1} parent=87 // pred_check
          %p683 = pneg %p85
        $region94: #{tpu_custom_call.1} parent=87 // pred_check_branch
          %685 = sbr.rel (%p683) target = $region96
        $region95: #{tpu_custom_call.1} parent=87 // pred_region
          %p686 = scmp.lt.s32.totalorder %s39, 1
          %s687 = scalar_select %p686, %s39, 1
          %s688 = smul.addr %s687, 2
          %s689 = smul.addr %s688, 8
          %s690 = scalar_lea.vmem %s1, %s689
        $region96: #{tpu_custom_call.1} parent=87 // pred_fallthru
          _
        // Predicated region
        $region97: #{tpu_custom_call.1} parent=87 // pred_check
          %p691 = pneg %p111
        $region98: #{tpu_custom_call.1} parent=87 // pred_check_branch
          %693 = sbr.rel (%p691) target = $region100
        $region99: #{tpu_custom_call.1} parent=87 // pred_region
          %s694 = sand.u32 %s39, 1
          %s695 = scalar_lea.sflag [#allocation6], %s694
          %s696 = sand.u32 %s101, 1
          %s697 = smul.addr %s696, 8
          %s698 = scalar_lea.vmem [#allocation5], %s697
          %700 = vsyncadd %s695, 0
          %s701 = smul.addr %s39, 8
          %s702 = scalar_lea.hbm %s2, %s701
          %s704 = sshll.u32 %s702, 4
          %s705 = int_to_ptr.hbm [resolvable:$true] %s704
          %s706 = sshll.u32 %s698, 4
          %s707 = int_to_ptr.vmem [resolvable:$true] %s706
          %709 = dma.hbm_to_vmem [thread:$0]  %s705, 128, %s707, %s695
        $region100: #{tpu_custom_call.1} parent=87 // pred_fallthru
          _
        // Predicated region
        $region101: #{tpu_custom_call.1} parent=87 // pred_check
          %p710 = pneg %p137
        $region102: #{tpu_custom_call.1} parent=87 // pred_check_branch
          %712 = sbr.rel (%p710) target = $region104
        $region103: #{tpu_custom_call.1} parent=87 // pred_region
          %p713 = scmp.lt.s32.totalorder %s39, 1
          %s714 = scalar_select %p713, %s39, 1
          %s715 = smul.addr %s714, 2
          %s716 = smul.addr %s715, 8
          %s717 = scalar_lea.vmem %s3, %s716
        $region104: #{tpu_custom_call.1} parent=87 // pred_fallthru
          _
      $region88: #{tpu_custom_call.1} parent=5 // pred_fallthru
        _
      %p718 = scmp.le.s32.totalorder 1, %s39
      %p719 = scmp.lt.s32.totalorder %s39, 3
      %p720 = pnand %p718, %p719
      %p721 = pneg %p720
      // Predicated region
      $region105: #{tpu_custom_call.1} parent=5 // pred_check
        _
      $region106: #{tpu_custom_call.1} parent=5 // pred_check_branch
        %723 = sbr.rel (%p720) target = $region108
      $region107: #{tpu_custom_call.1} parent=5 // pred_region
        %s724 = ssub.s32 %s39, 1
        %s725 = sand.u32 %s52, 1
        %s726 = scalar_lea.sflag [#allocation3], %s725
        %s727 = sand.u32 %s52, 1
        %s728 = smul.addr %s727, 8
        %s729 = scalar_lea.vmem [#allocation2], %s728
        // Predicated region
        $region109: #{tpu_custom_call.1} parent=107 // pred_check
          %p730 = pneg %p65
        $region110: #{tpu_custom_call.1} parent=107 // pred_check_branch
          %732 = sbr.rel (%p730) target = $region112
        $region111: #{tpu_custom_call.1} parent=107 // pred_region
          %734 = dma.done %s726, 128
        $region112: #{tpu_custom_call.1} parent=107 // pred_fallthru
          _
        %s735 = sand.u32 %s44, 1
        %s736 = scalar_lea.sflag [#allocation6], %s735
        %s737 = sand.u32 %s104, 1
        %s738 = smul.addr %s737, 8
        %s739 = scalar_lea.vmem [#allocation5], %s738
        // Predicated region
        $region113: #{tpu_custom_call.1} parent=107 // pred_check
          %p740 = pneg %p117
        $region114: #{tpu_custom_call.1} parent=107 // pred_check_branch
          %742 = sbr.rel (%p740) target = $region116
        $region115: #{tpu_custom_call.1} parent=107 // pred_region
          %744 = dma.done %s736, 128
        $region116: #{tpu_custom_call.1} parent=107 // pred_fallthru
          _
        // Predicated region
        $region117: #{tpu_custom_call.1} parent=107 // pred_check
          %p745 = pneg %p206
        $region118: #{tpu_custom_call.1} parent=107 // pred_check_branch
          %747 = sbr.rel (%p745) target = $region120
        $region119: #{tpu_custom_call.1} parent=107 // pred_region
          %749 = dma.done [#allocation6], 512
        $region120: #{tpu_custom_call.1} parent=107 // pred_fallthru
          _
        // Predicated region
        $region121: #{tpu_custom_call.1} parent=107 // pred_check
          %p750 = pneg %p248
        $region122: #{tpu_custom_call.1} parent=107 // pred_check_branch
          %752 = sbr.rel (%p750) target = $region124
        $region123: #{tpu_custom_call.1} parent=107 // pred_region
          %754 = dma.done [#allocation9], 512
        $region124: #{tpu_custom_call.1} parent=107 // pred_fallthru
          _
        // Predicated region
        $region125: #{tpu_custom_call.1} parent=107 // pred_check
          %p755 = pneg %p290
        $region126: #{tpu_custom_call.1} parent=107 // pred_check_branch
          %757 = sbr.rel (%p755) target = $region128
        $region127: #{tpu_custom_call.1} parent=107 // pred_region
          %759 = dma.done [#allocation9], 512
        $region128: #{tpu_custom_call.1} parent=107 // pred_fallthru
          _
        // Predicated region
        $region129: #{tpu_custom_call.1} parent=107 // pred_check
          %p760 = pneg %p332
        $region130: #{tpu_custom_call.1} parent=107 // pred_check_branch
          %762 = sbr.rel (%p760) target = $region132
        $region131: #{tpu_custom_call.1} parent=107 // pred_region
          %764 = dma.done [#allocation12], 512
        $region132: #{tpu_custom_call.1} parent=107 // pred_fallthru
          _
        %s765 = sand.u32 %s52, 1
        %s766 = scalar_lea.sflag [#allocation3], %s765
        %s767 = sand.u32 %s52, 1
        %s768 = smul.addr %s767, 8
        %s769 = scalar_lea.vmem [#allocation2], %s768
        %p770 = pneg %p65
        %p771 = pneg %p62
        %p772 = scmp.lt.s32.totalorder %s44, 1
        %s773 = scalar_select %p772, %s44, 1
        %s774 = smul.addr %s773, 2
        %s775 = smul.addr %s774, 8
        %s776 = scalar_lea.vmem %s1, %s775
        %p777 = pneg %p91
        %p778 = pneg %p88
        %s779 = sand.u32 %s44, 1
        %s780 = scalar_lea.sflag [#allocation6], %s779
        %s781 = sand.u32 %s104, 1
        %s782 = smul.addr %s781, 8
        %s783 = scalar_lea.vmem [#allocation5], %s782
        %p784 = pneg %p117
        %p785 = pneg %p114
        %p786 = scmp.lt.s32.totalorder %s44, 1
        %s787 = scalar_select %p786, %s44, 1
        %s788 = smul.addr %s787, 2
        %s789 = smul.addr %s788, 8
        %s790 = scalar_lea.vmem %s3, %s789
        %p791 = pneg %p143
        %p792 = pneg %p140
        %p793 = pneg %p164
        %p794 = pneg %p161
        %p795 = pneg %p185
        %p796 = pneg %p182
        %p797 = pneg %p206
        %p798 = pneg %p203
        %p799 = pneg %p227
        %p800 = pneg %p224
        %p801 = pneg %p248
        %p802 = pneg %p245
        %p803 = pneg %p269
        %p804 = pneg %p266
        %p805 = pneg %p290
        %p806 = pneg %p287
        %p807 = pneg %p311
        %p808 = pneg %p308
        %p809 = pneg %p332
        %p810 = pneg %p329
        %p811 = pneg %p353
        %p812 = pneg %p350
        %p813 = pneg %p374
        %p814 = pneg %p371
        %p815 = pneg %p395
        %p816 = pneg %p392
        %p817 = pneg %p416
        %p818 = pneg %p413
        %p819 = pneg %p437
        %p820 = pneg %p434
        %p821 = pneg %p458
        %p822 = pneg %p455
        %p823 = pneg %p479
        %p824 = pneg %p476
        %p825 = pneg %p500
        %p826 = pneg %p497
        %p827 = pneg %p521
        %p828 = pneg %p518
        %p829 = pneg %p547
        %p830 = pneg %p544
        %s831 = sand.u32 %s534, 1
        %s832 = scalar_lea.sflag [#allocation4], %s831
        %s833 = sand.u32 %s534, 1
        %s834 = smul.addr %s833, 8
        %s835 = scalar_lea.vmem [#allocation13], %s834
        %p836 = scmp.lt.s32.totalorder %s44, 1
        %s837 = scalar_select %p836, %s44, 1
        %s838 = smul.addr %s837, 2
        %s839 = smul.addr %s838, 8
        %s840 = scalar_lea.vmem %s1, %s839
        %p841 = scmp.lt.s32.totalorder %s44, 1
        %s842 = scalar_select %p841, %s44, 1
        %s843 = smul.addr %s842, 2
        %s844 = smul.addr %s843, 8
        %s845 = scalar_lea.vmem %s3, %s844
        %v846 = vld [vmem:[%s729] sm:$0xff]
        %v847 = vld [vmem:[%s840] sm:$0xff]
        %v848 = vld [vmem:[%s840 + $0x8] sm:$0xff]
        %v849 = vld [vmem:[%s739] sm:$0xff]
        %v850 = vld [vmem:[%s845] sm:$0xff]
        %v851 = vld [vmem:[%s845 + $0x8] sm:$0xff]
        %v852 = vld [vmem:[%s4] sm:$0xff]
        %v853 = vld [vmem:[%s4 + $0x8] sm:$0xff]
        %v854 = vld [vmem:[%s4 + $0x10] sm:$0xff]
        %v855 = vld [vmem:[%s4 + $0x18] sm:$0xff]
        %v856 = vld [vmem:[%s5] sm:$0x1]
        %v857 = vadd.f32 %v846, %v849
        %v858 = vadd.f32 %v847, %v850
        %v859 = vadd.f32 %v848, %v851
        %v861 = vperm.slane %v856, 0
        %vm863 = vcmask 261120
        %v865 = vsel %vm863, %v857, 0
        %867 = vmatpush.msra.mxu0 0.0
        %868 = vmatpush.msra.mxu0 0.0
        %869 = vmatpush.msra.mxu0 0.0
        %870 = vmatpush.msra.mxu0 0.0
        %871 = vmatpush.msra.mxu0 0.0
        %872 = vmatpush.msra.mxu0 0.0
        %873 = vmatpush.msra.mxu0 0.0
        %874 = vmatpush.msra.mxu0 0.0
        %875 = vmatpush.msra.mxu0 0.0
        %876 = vmatpush.msra.mxu0 0.0
        %877 = vmatpush.msra.mxu0 0.0
        %878 = vmatpush.msra.mxu0 0.0
        %879 = vmatpush.msra.mxu0 %v855
        %880 = vmatpush.msra.mxu0 %v854
        %881 = vmatpush.msra.mxu0 %v853
        %882 = vmatpush.msra.mxu0 %v852
        %883 = vmatmul.f32.gmra.mxu0 %v865
        %v884 = vpop.f32.mrf.mxu0
        %v885 = vadd.f32 %v861, %v884
        %886 = vdwg.mxu0
        %891 = vrot.lane.b32.xlu0 %v852, 96
        %v892 = vpop.permute.xlu0 %891
        %893 = vrot.lane.b32.xlu0 %v853, 96
        %v894 = vpop.permute.xlu0 %893
        %895 = vrot.lane.b32.xlu0 %v854, 96
        %v896 = vpop.permute.xlu0 %895
        %897 = vrot.lane.b32.xlu0 %v855, 96
        %v898 = vpop.permute.xlu0 %897
        %903 = vrot.lane.b32.xlu0 %v861, 96
        %v904 = vpop.permute.xlu0 %903
        %v907 = vsel %vm863, %v858, 0
        %v910 = vsel %vm863, %v859, 0
        %912 = vmatpush.msra.mxu0 0.0
        %913 = vmatpush.msra.mxu0 0.0
        %914 = vmatpush.msra.mxu0 0.0
        %915 = vmatpush.msra.mxu0 0.0
        %916 = vmatpush.msra.mxu0 0.0
        %917 = vmatpush.msra.mxu0 0.0
        %918 = vmatpush.msra.mxu0 0.0
        %919 = vmatpush.msra.mxu0 0.0
        %920 = vmatpush.msra.mxu0 0.0
        %921 = vmatpush.msra.mxu0 0.0
        %922 = vmatpush.msra.mxu0 0.0
        %923 = vmatpush.msra.mxu0 0.0
        %924 = vmatpush.msra.mxu0 %v898
        %925 = vmatpush.msra.mxu0 %v896
        %926 = vmatpush.msra.mxu0 %v894
        %927 = vmatpush.msra.mxu0 %v892
        %928 = vmatmul.f32.gmra.mxu0 %v907
        %v929 = vpop.f32.mrf.mxu0
        %v930 = vadd.f32 %v904, %v929
        %931 = vmatmul.f32.gmra.mxu0 %v910
        %v932 = vpop.f32.mrf.mxu0
        %v933 = vadd.f32 %v904, %v932
        %934 = vdwg.mxu0
        %935 = vrot.lane.b32.xlu0 %v852, 64
        %v936 = vpop.permute.xlu0 %935
        %937 = vrot.lane.b32.xlu0 %v853, 64
        %v938 = vpop.permute.xlu0 %937
        %939 = vrot.lane.b32.xlu0 %v854, 64
        %v940 = vpop.permute.xlu0 %939
        %941 = vrot.lane.b32.xlu0 %v855, 64
        %v942 = vpop.permute.xlu0 %941
        %947 = vrot.lane.b32.xlu0 %v861, 64
        %v948 = vpop.permute.xlu0 %947
        %v951 = vsel %vm863, %v847, 0
        %v954 = vsel %vm863, %v848, 0
        %956 = vmatpush.msra.mxu0 0.0
        %957 = vmatpush.msra.mxu0 0.0
        %958 = vmatpush.msra.mxu0 0.0
        %959 = vmatpush.msra.mxu0 0.0
        %960 = vmatpush.msra.mxu0 0.0
        %961 = vmatpush.msra.mxu0 0.0
        %962 = vmatpush.msra.mxu0 0.0
        %963 = vmatpush.msra.mxu0 0.0
        %964 = vmatpush.msra.mxu0 0.0
        %965 = vmatpush.msra.mxu0 0.0
        %966 = vmatpush.msra.mxu0 0.0
        %967 = vmatpush.msra.mxu0 0.0
        %968 = vmatpush.msra.mxu0 %v942
        %969 = vmatpush.msra.mxu0 %v940
        %970 = vmatpush.msra.mxu0 %v938
        %971 = vmatpush.msra.mxu0 %v936
        %972 = vmatmul.f32.gmra.mxu0 %v951
        %v973 = vpop.f32.mrf.mxu0
        %v974 = vadd.f32 %v948, %v973
        %975 = vmatmul.f32.gmra.mxu0 %v954
        %v976 = vpop.f32.mrf.mxu0
        %v977 = vadd.f32 %v948, %v976
        %978 = vdwg.mxu0
        %v979 = vld [vmem:[#allocation7] sm:$0xff]
        %v980 = vld [vmem:[#allocation7 + $0x8] sm:$0xff]
        %v981 = vld [vmem:[#allocation7 + $0x10] sm:$0xff]
        %v982 = vld [vmem:[#allocation7 + $0x18] sm:$0xff]
        %v983 = vmul.f32 %v885, 0.35355338
        %vm984 = vcmask 64512
        %v986 = vsel %vm984, %v983, 0
        %v989 = vsel %vm984, %v930, 0
        %v992 = vsel %vm984, %v933, 0
        %994 = vmatpush.xpose.msra.mxu0 0.0
        %995 = vmatpush.xpose.msra.mxu0 0.0
        %996 = vmatpush.xpose.msra.mxu0 0.0
        %997 = vmatpush.xpose.msra.mxu0 0.0
        %998 = vmatpush.xpose.msra.mxu0 0.0
        %999 = vmatpush.xpose.msra.mxu0 0.0
        %1000 = vmatpush.xpose.msra.mxu0 0.0
        %1001 = vmatpush.xpose.msra.mxu0 0.0
        %1002 = vmatpush.xpose.msra.mxu0 0.0
        %1003 = vmatpush.xpose.msra.mxu0 0.0
        %1004 = vmatpush.xpose.msra.mxu0 0.0
        %1005 = vmatpush.xpose.msra.mxu0 0.0
        %1006 = vmatpush.xpose.msra.mxu0 0.0
        %1007 = vmatpush.xpose.msra.mxu0 0.0
        %1008 = vmatpush.xpose.msra.mxu0 %v992
        %1009 = vmatpush.xpose.msra.mxu0 %v989
        %1010 = vmatmul.f32.gmra.mxu0 %v986
        %v1011 = vpop.f32.mrf.mxu0
        %v1012 = vadd.f32 0.0, %v1011
        %1013 = vdwg.mxu0
        %vm1014 = vcmask 130048
        %v1015 = vsel %vm1014, %v1012, -inf
        %1016 = vmax.xlane.f32.xlu0 %v1015
        %v1017 = vpop.xlane.xlu0 %1016
        %v1018 = vsub.f32 %v1012, %v1017
        %v1019 = vmul.f32 %v1018, 1.442695
        %v1020 = vpow.pop %v1019
        %v1021 = vsel %vm1014, %v1020, 0.0
        %1022 = vadd.xlane.f32.xlu0 %v1021
        %v1023 = vpop.xlane.xlu0 %1022
        %v1024 = vrcp.pop %v1023
        %v1025 = vmul.f32 %v1020, %v1024
        %v1027 = vsel %vm1014, %v1025, 0
        %1029 = vmatpush.msra.mxu0 0.0
        %1030 = vmatpush.msra.mxu0 0.0
        %1031 = vmatpush.msra.mxu0 0.0
        %1032 = vmatpush.msra.mxu0 0.0
        %1033 = vmatpush.msra.mxu0 0.0
        %1034 = vmatpush.msra.mxu0 0.0
        %1035 = vmatpush.msra.mxu0 0.0
        %1036 = vmatpush.msra.mxu0 0.0
        %1037 = vmatpush.msra.mxu0 0.0
        %1038 = vmatpush.msra.mxu0 0.0
        %1039 = vmatpush.msra.mxu0 0.0
        %1040 = vmatpush.msra.mxu0 0.0
        %1041 = vmatpush.msra.mxu0 0.0
        %1042 = vmatpush.msra.mxu0 0.0
        %1043 = vmatpush.msra.mxu0 %v977
        %1044 = vmatpush.msra.mxu0 %v974
        %1045 = vmatmul.f32.gmra.mxu0 %v1027
        %v1046 = vpop.f32.mrf.mxu0
        %v1047 = vadd.f32 0.0, %v1046
        %1048 = vdwg.mxu0
        %1049 = vrot.lane.b32.xlu0 %v983, 120
        %v1050 = vpop.permute.xlu0 %1049
        %1051 = vrot.lane.b32.xlu0 %v930, 120
        %v1052 = vpop.permute.xlu0 %1051
        %1053 = vrot.lane.b32.xlu0 %v933, 120
        %v1054 = vpop.permute.xlu0 %1053
        %v1055 = vsel %vm984, %v1050, 0
        %v1057 = vsel %vm984, %v1052, 0
        %v1059 = vsel %vm984, %v1054, 0
        %1061 = vmatpush.xpose.msra.mxu0 0.0
        %1062 = vmatpush.xpose.msra.mxu0 0.0
        %1063 = vmatpush.xpose.msra.mxu0 0.0
        %1064 = vmatpush.xpose.msra.mxu0 0.0
        %1065 = vmatpush.xpose.msra.mxu0 0.0
        %1066 = vmatpush.xpose.msra.mxu0 0.0
        %1067 = vmatpush.xpose.msra.mxu0 0.0
        %1068 = vmatpush.xpose.msra.mxu0 0.0
        %1069 = vmatpush.xpose.msra.mxu0 0.0
        %1070 = vmatpush.xpose.msra.mxu0 0.0
        %1071 = vmatpush.xpose.msra.mxu0 0.0
        %1072 = vmatpush.xpose.msra.mxu0 0.0
        %1073 = vmatpush.xpose.msra.mxu0 0.0
        %1074 = vmatpush.xpose.msra.mxu0 0.0
        %1075 = vmatpush.xpose.msra.mxu0 %v1059
        %1076 = vmatpush.xpose.msra.mxu0 %v1057
        %1077 = vmatmul.f32.gmra.mxu0 %v1055
        %v1078 = vpop.f32.mrf.mxu0
        %v1079 = vadd.f32 0.0, %v1078
        %1080 = vdwg.mxu0
        %v1081 = vsel %vm1014, %v1079, -inf
        %1082 = vmax.xlane.f32.xlu0 %v1081
        %v1083 = vpop.xlane.xlu0 %1082
        %v1084 = vsub.f32 %v1079, %v1083
        %v1085 = vmul.f32 %v1084, 1.442695
        %v1086 = vpow.pop %v1085
        %v1087 = vsel %vm1014, %v1086, 0.0
        %1088 = vadd.xlane.f32.xlu0 %v1087
        %v1089 = vpop.xlane.xlu0 %1088
        %v1090 = vrcp.pop %v1089
        %v1091 = vmul.f32 %v1086, %v1090
        %1094 = vrot.lane.b32.xlu0 %v974, 120
        %v1095 = vpop.permute.xlu0 %1094
        %1096 = vrot.lane.b32.xlu0 %v977, 120
        %v1097 = vpop.permute.xlu0 %1096
        %v1101 = vsel %vm1014, %v1091, 0
        %1103 = vmatpush.msra.mxu0 0.0
        %1104 = vmatpush.msra.mxu0 0.0
        %1105 = vmatpush.msra.mxu0 0.0
        %1106 = vmatpush.msra.mxu0 0.0
        %1107 = vmatpush.msra.mxu0 0.0
        %1108 = vmatpush.msra.mxu0 0.0
        %1109 = vmatpush.msra.mxu0 0.0
        %1110 = vmatpush.msra.mxu0 0.0
        %1111 = vmatpush.msra.mxu0 0.0
        %1112 = vmatpush.msra.mxu0 0.0
        %1113 = vmatpush.msra.mxu0 0.0
        %1114 = vmatpush.msra.mxu0 0.0
        %1115 = vmatpush.msra.mxu0 0.0
        %1116 = vmatpush.msra.mxu0 0.0
        %1117 = vmatpush.msra.mxu0 %v1097
        %1118 = vmatpush.msra.mxu0 %v1095
        %1119 = vmatmul.f32.gmra.mxu0 %v1101
        %v1120 = vpop.f32.mrf.mxu0
        %v1121 = vadd.f32 0.0, %v1120
        %1122 = vdwg.mxu0
        %v1124 = vsel %vm984, %v1121, 0
        %1126 = vmatpush.msra.mxu0 0.0
        %1127 = vmatpush.msra.mxu0 0.0
        %1128 = vmatpush.msra.mxu0 0.0
        %1129 = vmatpush.msra.mxu0 0.0
        %1130 = vmatpush.msra.mxu0 0.0
        %1131 = vmatpush.msra.mxu0 0.0
        %1132 = vmatpush.msra.mxu0 0.0
        %1133 = vmatpush.msra.mxu0 0.0
        %1134 = vmatpush.msra.mxu0 0.0
        %1135 = vmatpush.msra.mxu0 0.0
        %1136 = vmatpush.msra.mxu0 0.0
        %1137 = vmatpush.msra.mxu0 0.0
        %1138 = vmatpush.msra.mxu0 0.0
        %1139 = vmatpush.msra.mxu0 0.0
        %1140 = vmatpush.msra.mxu0 0.0
        %1141 = vmatpush.msra.mxu0 %v980
        %1142 = vmatmul.f32.gmra.mxu0 %v1124
        %v1143 = vpop.f32.mrf.mxu0
        %v1144 = vadd.f32 0.0, %v1143
        %1145 = vdwg.mxu0
        %v1147 = vsel %vm984, %v1047, 0
        %1149 = vmatpush.msra.mxu0 0.0
        %1150 = vmatpush.msra.mxu0 0.0
        %1151 = vmatpush.msra.mxu0 0.0
        %1152 = vmatpush.msra.mxu0 0.0
        %1153 = vmatpush.msra.mxu0 0.0
        %1154 = vmatpush.msra.mxu0 0.0
        %1155 = vmatpush.msra.mxu0 0.0
        %1156 = vmatpush.msra.mxu0 0.0
        %1157 = vmatpush.msra.mxu0 0.0
        %1158 = vmatpush.msra.mxu0 0.0
        %1159 = vmatpush.msra.mxu0 0.0
        %1160 = vmatpush.msra.mxu0 0.0
        %1161 = vmatpush.msra.mxu0 0.0
        %1162 = vmatpush.msra.mxu0 0.0
        %1163 = vmatpush.msra.mxu0 0.0
        %1164 = vmatpush.msra.mxu0 %v979
        %1165 = vmatmul.f32.gmra.mxu0 %v1147
        %v1166 = vpop.f32.mrf.mxu0
        %v1167 = vadd.f32 %v1144, %v1166
        %1168 = vdwg.mxu0
        %1169 = vrot.lane.b32.xlu0 %v983, 112
        %v1170 = vpop.permute.xlu0 %1169
        %1171 = vrot.lane.b32.xlu0 %v930, 112
        %v1172 = vpop.permute.xlu0 %1171
        %1173 = vrot.lane.b32.xlu0 %v933, 112
        %v1174 = vpop.permute.xlu0 %1173
        %v1175 = vsel %vm984, %v1170, 0
        %v1177 = vsel %vm984, %v1172, 0
        %v1179 = vsel %vm984, %v1174, 0
        %1181 = vmatpush.xpose.msra.mxu0 0.0
        %1182 = vmatpush.xpose.msra.mxu0 0.0
        %1183 = vmatpush.xpose.msra.mxu0 0.0
        %1184 = vmatpush.xpose.msra.mxu0 0.0
        %1185 = vmatpush.xpose.msra.mxu0 0.0
        %1186 = vmatpush.xpose.msra.mxu0 0.0
        %1187 = vmatpush.xpose.msra.mxu0 0.0
        %1188 = vmatpush.xpose.msra.mxu0 0.0
        %1189 = vmatpush.xpose.msra.mxu0 0.0
        %1190 = vmatpush.xpose.msra.mxu0 0.0
        %1191 = vmatpush.xpose.msra.mxu0 0.0
        %1192 = vmatpush.xpose.msra.mxu0 0.0
        %1193 = vmatpush.xpose.msra.mxu0 0.0
        %1194 = vmatpush.xpose.msra.mxu0 0.0
        %1195 = vmatpush.xpose.msra.mxu0 %v1179
        %1196 = vmatpush.xpose.msra.mxu0 %v1177
        %1197 = vmatmul.f32.gmra.mxu0 %v1175
        %v1198 = vpop.f32.mrf.mxu0
        %v1199 = vadd.f32 0.0, %v1198
        %1200 = vdwg.mxu0
        %v1201 = vsel %vm1014, %v1199, -inf
        %1202 = vmax.xlane.f32.xlu0 %v1201
        %v1203 = vpop.xlane.xlu0 %1202
        %v1204 = vsub.f32 %v1199, %v1203
        %v1205 = vmul.f32 %v1204, 1.442695
        %v1206 = vpow.pop %v1205
        %v1207 = vsel %vm1014, %v1206, 0.0
        %1208 = vadd.xlane.f32.xlu0 %v1207
        %v1209 = vpop.xlane.xlu0 %1208
        %v1210 = vrcp.pop %v1209
        %v1211 = vmul.f32 %v1206, %v1210
        %1212 = vrot.lane.b32.xlu0 %v974, 112
        %v1213 = vpop.permute.xlu0 %1212
        %1214 = vrot.lane.b32.xlu0 %v977, 112
        %v1215 = vpop.permute.xlu0 %1214
        %v1219 = vsel %vm1014, %v1211, 0
        %1221 = vmatpush.msra.mxu0 0.0
        %1222 = vmatpush.msra.mxu0 0.0
        %1223 = vmatpush.msra.mxu0 0.0
        %1224 = vmatpush.msra.mxu0 0.0
        %1225 = vmatpush.msra.mxu0 0.0
        %1226 = vmatpush.msra.mxu0 0.0
        %1227 = vmatpush.msra.mxu0 0.0
        %1228 = vmatpush.msra.mxu0 0.0
        %1229 = vmatpush.msra.mxu0 0.0
        %1230 = vmatpush.msra.mxu0 0.0
        %1231 = vmatpush.msra.mxu0 0.0
        %1232 = vmatpush.msra.mxu0 0.0
        %1233 = vmatpush.msra.mxu0 0.0
        %1234 = vmatpush.msra.mxu0 0.0
        %1235 = vmatpush.msra.mxu0 %v1215
        %1236 = vmatpush.msra.mxu0 %v1213
        %1237 = vmatmul.f32.gmra.mxu0 %v1219
        %v1238 = vpop.f32.mrf.mxu0
        %v1239 = vadd.f32 0.0, %v1238
        %1240 = vdwg.mxu0
        %v1242 = vsel %vm984, %v1239, 0
        %1244 = vmatpush.msra.mxu0 0.0
        %1245 = vmatpush.msra.mxu0 0.0
        %1246 = vmatpush.msra.mxu0 0.0
        %1247 = vmatpush.msra.mxu0 0.0
        %1248 = vmatpush.msra.mxu0 0.0
        %1249 = vmatpush.msra.mxu0 0.0
        %1250 = vmatpush.msra.mxu0 0.0
        %1251 = vmatpush.msra.mxu0 0.0
        %1252 = vmatpush.msra.mxu0 0.0
        %1253 = vmatpush.msra.mxu0 0.0
        %1254 = vmatpush.msra.mxu0 0.0
        %1255 = vmatpush.msra.mxu0 0.0
        %1256 = vmatpush.msra.mxu0 0.0
        %1257 = vmatpush.msra.mxu0 0.0
        %1258 = vmatpush.msra.mxu0 0.0
        %1259 = vmatpush.msra.mxu0 %v981
        %1260 = vmatmul.f32.gmra.mxu0 %v1242
        %v1261 = vpop.f32.mrf.mxu0
        %v1262 = vadd.f32 0.0, %v1261
        %1263 = vdwg.mxu0
        %v1264 = vadd.f32 %v1167, %v1262
        %1265 = vrot.lane.b32.xlu0 %v983, 104
        %v1266 = vpop.permute.xlu0 %1265
        %1267 = vrot.lane.b32.xlu0 %v930, 104
        %v1268 = vpop.permute.xlu0 %1267
        %1269 = vrot.lane.b32.xlu0 %v933, 104
        %v1270 = vpop.permute.xlu0 %1269
        %v1271 = vsel %vm984, %v1266, 0
        %v1273 = vsel %vm984, %v1268, 0
        %v1275 = vsel %vm984, %v1270, 0
        %1277 = vmatpush.xpose.msra.mxu0 0.0
        %1278 = vmatpush.xpose.msra.mxu0 0.0
        %1279 = vmatpush.xpose.msra.mxu0 0.0
        %1280 = vmatpush.xpose.msra.mxu0 0.0
        %1281 = vmatpush.xpose.msra.mxu0 0.0
        %1282 = vmatpush.xpose.msra.mxu0 0.0
        %1283 = vmatpush.xpose.msra.mxu0 0.0
        %1284 = vmatpush.xpose.msra.mxu0 0.0
        %1285 = vmatpush.xpose.msra.mxu0 0.0
        %1286 = vmatpush.xpose.msra.mxu0 0.0
        %1287 = vmatpush.xpose.msra.mxu0 0.0
        %1288 = vmatpush.xpose.msra.mxu0 0.0
        %1289 = vmatpush.xpose.msra.mxu0 0.0
        %1290 = vmatpush.xpose.msra.mxu0 0.0
        %1291 = vmatpush.xpose.msra.mxu0 %v1275
        %1292 = vmatpush.xpose.msra.mxu0 %v1273
        %1293 = vmatmul.f32.gmra.mxu0 %v1271
        %v1294 = vpop.f32.mrf.mxu0
        %v1295 = vadd.f32 0.0, %v1294
        %1296 = vdwg.mxu0
        %v1297 = vsel %vm1014, %v1295, -inf
        %1298 = vmax.xlane.f32.xlu0 %v1297
        %v1299 = vpop.xlane.xlu0 %1298
        %v1300 = vsub.f32 %v1295, %v1299
        %v1301 = vmul.f32 %v1300, 1.442695
        %v1302 = vpow.pop %v1301
        %v1303 = vsel %vm1014, %v1302, 0.0
        %1304 = vadd.xlane.f32.xlu0 %v1303
        %v1305 = vpop.xlane.xlu0 %1304
        %v1306 = vrcp.pop %v1305
        %v1307 = vmul.f32 %v1302, %v1306
        %1308 = vrot.lane.b32.xlu0 %v974, 104
        %v1309 = vpop.permute.xlu0 %1308
        %1310 = vrot.lane.b32.xlu0 %v977, 104
        %v1311 = vpop.permute.xlu0 %1310
        %v1315 = vsel %vm1014, %v1307, 0
        %1317 = vmatpush.msra.mxu0 0.0
        %1318 = vmatpush.msra.mxu0 0.0
        %1319 = vmatpush.msra.mxu0 0.0
        %1320 = vmatpush.msra.mxu0 0.0
        %1321 = vmatpush.msra.mxu0 0.0
        %1322 = vmatpush.msra.mxu0 0.0
        %1323 = vmatpush.msra.mxu0 0.0
        %1324 = vmatpush.msra.mxu0 0.0
        %1325 = vmatpush.msra.mxu0 0.0
        %1326 = vmatpush.msra.mxu0 0.0
        %1327 = vmatpush.msra.mxu0 0.0
        %1328 = vmatpush.msra.mxu0 0.0
        %1329 = vmatpush.msra.mxu0 0.0
        %1330 = vmatpush.msra.mxu0 0.0
        %1331 = vmatpush.msra.mxu0 %v1311
        %1332 = vmatpush.msra.mxu0 %v1309
        %1333 = vmatmul.f32.gmra.mxu0 %v1315
        %v1334 = vpop.f32.mrf.mxu0
        %v1335 = vadd.f32 0.0, %v1334
        %1336 = vdwg.mxu0
        %v1338 = vsel %vm984, %v1335, 0
        %1340 = vmatpush.msra.mxu0 0.0
        %1341 = vmatpush.msra.mxu0 0.0
        %1342 = vmatpush.msra.mxu0 0.0
        %1343 = vmatpush.msra.mxu0 0.0
        %1344 = vmatpush.msra.mxu0 0.0
        %1345 = vmatpush.msra.mxu0 0.0
        %1346 = vmatpush.msra.mxu0 0.0
        %1347 = vmatpush.msra.mxu0 0.0
        %1348 = vmatpush.msra.mxu0 0.0
        %1349 = vmatpush.msra.mxu0 0.0
        %1350 = vmatpush.msra.mxu0 0.0
        %1351 = vmatpush.msra.mxu0 0.0
        %1352 = vmatpush.msra.mxu0 0.0
        %1353 = vmatpush.msra.mxu0 0.0
        %1354 = vmatpush.msra.mxu0 0.0
        %1355 = vmatpush.msra.mxu0 %v982
        %1356 = vmatmul.f32.gmra.mxu0 %v1338
        %v1357 = vpop.f32.mrf.mxu0
        %v1358 = vadd.f32 0.0, %v1357
        %1359 = vdwg.mxu0
        %v1360 = vadd.f32 %v1264, %v1358
        %v1361 = vld [vmem:[%s7] sm:$0x1]
        %v1363 = vperm.slane %v1361, 0
        %v1365 = vadd.f32 %v1360, %v1363
        %v1366 = vld [vmem:[%s16] sm:$0x1]
        %v1367 = vld [vmem:[%s17] sm:$0x1]
        %v1368 = vadd.f32 %v846, %v1365
        %v1369 = vsel %vm863, %v1368, 0.0
        %1370 = vadd.xlane.f32.xlu0 %v1369
        %v1371 = vpop.xlane.xlu0 %1370
        %v1372 = vrcp.pop 32.0
        %v1373 = vmul.f32 32.0, %v1372
        %v1374 = vsub.f32 1.0, %v1373
        %v1375 = vmul.f32 %v1372, %v1374
        %v1376 = vadd.f32 %v1372, %v1375
        %vm1377 = vweird.f32 %v1372
        %v1378 = vsel %vm1377, %v1372, %v1376
        %v1379 = vmul.f32 %v1371, %v1378
        %v1380 = vsub.f32 %v1368, %v1379
        %v1381 = vmul.f32 %v1380, %v1380
        %v1382 = vsel %vm863, %v1381, 0.0
        %1383 = vadd.xlane.f32.xlu0 %v1382
        %v1384 = vpop.xlane.xlu0 %1383
        %v1385 = vmul.f32 %v1384, %v1378
        %v1386 = vadd.f32 %v1385, 1e-05
        %v1387 = vrsqrt.pop %v1386
        %v1388 = vmul.f32 %v1387, %v1386
        %v1389 = vmul.f32 %v1388, %v1387
        %v1390 = vmul.f32 0.5, %v1389
        %v1391 = vsub.f32 1.5, %v1390
        %v1392 = vmul.f32 %v1387, %v1391
        %vm1393 = vweird.f32 %v1386
        %vm1394 = vweird.f32 %v1387
        %vm1395 = vmor %vm1393, %vm1394
        %v1396 = vsel %vm1395, %v1387, %v1392
        %v1397 = vmul.f32 %v1380, %v1396
        %v1399 = vperm.slane %v1366, 0
        %v1401 = vmul.f32 %v1397, %v1399
        %v1403 = vperm.slane %v1367, 0
        %v1405 = vadd.f32 %v1401, %v1403
        %v1406 = vld [vmem:[#allocation8] sm:$0xff]
        %v1407 = vld [vmem:[#allocation8 + $0x8] sm:$0xff]
        %v1408 = vld [vmem:[#allocation8 + $0x10] sm:$0xff]
        %v1409 = vld [vmem:[#allocation8 + $0x18] sm:$0xff]
        %v1410 = vld [vmem:[%s9] sm:$0x1]
        %v1411 = vadd.f32 %v1405, %v849
        %v1413 = vperm.slane %v1410, 0
        %v1416 = vsel %vm863, %v1411, 0
        %1418 = vmatpush.msra.mxu0 0.0
        %1419 = vmatpush.msra.mxu0 0.0
        %1420 = vmatpush.msra.mxu0 0.0
        %1421 = vmatpush.msra.mxu0 0.0
        %1422 = vmatpush.msra.mxu0 0.0
        %1423 = vmatpush.msra.mxu0 0.0
        %1424 = vmatpush.msra.mxu0 0.0
        %1425 = vmatpush.msra.mxu0 0.0
        %1426 = vmatpush.msra.mxu0 0.0
        %1427 = vmatpush.msra.mxu0 0.0
        %1428 = vmatpush.msra.mxu0 0.0
        %1429 = vmatpush.msra.mxu0 0.0
        %1430 = vmatpush.msra.mxu0 %v1409
        %1431 = vmatpush.msra.mxu0 %v1408
        %1432 = vmatpush.msra.mxu0 %v1407
        %1433 = vmatpush.msra.mxu0 %v1406
        %1434 = vmatmul.f32.gmra.mxu0 %v1416
        %v1435 = vpop.f32.mrf.mxu0
        %v1436 = vadd.f32 %v1413, %v1435
        %1437 = vdwg.mxu0
        %1442 = vrot.lane.b32.xlu0 %v1406, 64
        %v1443 = vpop.permute.xlu0 %1442
        %1444 = vrot.lane.b32.xlu0 %v1407, 64
        %v1445 = vpop.permute.xlu0 %1444
        %1446 = vrot.lane.b32.xlu0 %v1408, 64
        %v1447 = vpop.permute.xlu0 %1446
        %1448 = vrot.lane.b32.xlu0 %v1409, 64
        %v1449 = vpop.permute.xlu0 %1448
        %1454 = vrot.lane.b32.xlu0 %v1413, 64
        %v1455 = vpop.permute.xlu0 %1454
        %v1458 = vsel %vm863, %v1405, 0
        %1460 = vmatpush.msra.mxu0 0.0
        %1461 = vmatpush.msra.mxu0 0.0
        %1462 = vmatpush.msra.mxu0 0.0
        %1463 = vmatpush.msra.mxu0 0.0
        %1464 = vmatpush.msra.mxu0 0.0
        %1465 = vmatpush.msra.mxu0 0.0
        %1466 = vmatpush.msra.mxu0 0.0
        %1467 = vmatpush.msra.mxu0 0.0
        %1468 = vmatpush.msra.mxu0 0.0
        %1469 = vmatpush.msra.mxu0 0.0
        %1470 = vmatpush.msra.mxu0 0.0
        %1471 = vmatpush.msra.mxu0 0.0
        %1472 = vmatpush.msra.mxu0 %v1449
        %1473 = vmatpush.msra.mxu0 %v1447
        %1474 = vmatpush.msra.mxu0 %v1445
        %1475 = vmatpush.msra.mxu0 %v1443
        %1476 = vmatmul.f32.gmra.mxu0 %v1458
        %v1477 = vpop.f32.mrf.mxu0
        %v1478 = vadd.f32 %v1455, %v1477
        %1479 = vdwg.mxu0
        %v1480 = vld [vmem:[#allocation10] sm:$0xff]
        %v1481 = vld [vmem:[#allocation10 + $0x8] sm:$0xff]
        %v1482 = vld [vmem:[#allocation10 + $0x10] sm:$0xff]
        %v1483 = vld [vmem:[#allocation10 + $0x18] sm:$0xff]
        %v1484 = vmul.f32 %v1436, 0.35355338
        %1486 = vrot.lane.b32.xlu0 %v1436, 96
        %v1487 = vpop.permute.xlu0 %1486
        %v1489 = vsel %vm984, %v1484, 0
        %v1491 = vsel %vm984, %v1487, 0
        %1493 = vmatpush.xpose.msra.mxu0 0.0
        %1494 = vmatpush.xpose.msra.mxu0 0.0
        %1495 = vmatpush.xpose.msra.mxu0 0.0
        %1496 = vmatpush.xpose.msra.mxu0 0.0
        %1497 = vmatpush.xpose.msra.mxu0 0.0
        %1498 = vmatpush.xpose.msra.mxu0 0.0
        %1499 = vmatpush.xpose.msra.mxu0 0.0
        %1500 = vmatpush.xpose.msra.mxu0 0.0
        %1501 = vmatpush.xpose.msra.mxu0 0.0
        %1502 = vmatpush.xpose.msra.mxu0 0.0
        %1503 = vmatpush.xpose.msra.mxu0 0.0
        %1504 = vmatpush.xpose.msra.mxu0 0.0
        %1505 = vmatpush.xpose.msra.mxu0 0.0
        %1506 = vmatpush.xpose.msra.mxu0 0.0
        %1507 = vmatpush.xpose.msra.mxu0 0.0
        %1508 = vmatpush.xpose.msra.mxu0 %v1491
        %1509 = vmatmul.f32.gmra.mxu0 %v1489
        %v1510 = vpop.f32.mrf.mxu0
        %v1511 = vadd.f32 0.0, %v1510
        %1512 = vdwg.mxu0
        %v1513 = vsel %vm984, %v1511, -inf
        %1514 = vmax.xlane.f32.xlu0 %v1513
        %v1515 = vpop.xlane.xlu0 %1514
        %v1516 = vsub.f32 %v1511, %v1515
        %v1517 = vmul.f32 %v1516, 1.442695
        %v1518 = vpow.pop %v1517
        %v1519 = vsel %vm984, %v1518, 0.0
        %1520 = vadd.xlane.f32.xlu0 %v1519
        %v1521 = vpop.xlane.xlu0 %1520
        %v1522 = vrcp.pop %v1521
        %v1523 = vmul.f32 %v1518, %v1522
        %v1525 = vsel %vm984, %v1523, 0
        %1527 = vmatpush.msra.mxu0 0.0
        %1528 = vmatpush.msra.mxu0 0.0
        %1529 = vmatpush.msra.mxu0 0.0
        %1530 = vmatpush.msra.mxu0 0.0
        %1531 = vmatpush.msra.mxu0 0.0
        %1532 = vmatpush.msra.mxu0 0.0
        %1533 = vmatpush.msra.mxu0 0.0
        %1534 = vmatpush.msra.mxu0 0.0
        %1535 = vmatpush.msra.mxu0 0.0
        %1536 = vmatpush.msra.mxu0 0.0
        %1537 = vmatpush.msra.mxu0 0.0
        %1538 = vmatpush.msra.mxu0 0.0
        %1539 = vmatpush.msra.mxu0 0.0
        %1540 = vmatpush.msra.mxu0 0.0
        %1541 = vmatpush.msra.mxu0 0.0
        %1542 = vmatpush.msra.mxu0 %v1478
        %1543 = vmatmul.f32.gmra.mxu0 %v1525
        %v1544 = vpop.f32.mrf.mxu0
        %v1545 = vadd.f32 0.0, %v1544
        %1546 = vdwg.mxu0
        %1547 = vrot.lane.b32.xlu0 %v1484, 120
        %v1548 = vpop.permute.xlu0 %1547
        %1549 = vrot.lane.b32.xlu0 %v1436, 88
        %v1550 = vpop.permute.xlu0 %1549
        %v1551 = vsel %vm984, %v1548, 0
        %v1553 = vsel %vm984, %v1550, 0
        %1555 = vmatpush.xpose.msra.mxu0 0.0
        %1556 = vmatpush.xpose.msra.mxu0 0.0
        %1557 = vmatpush.xpose.msra.mxu0 0.0
        %1558 = vmatpush.xpose.msra.mxu0 0.0
        %1559 = vmatpush.xpose.msra.mxu0 0.0
        %1560 = vmatpush.xpose.msra.mxu0 0.0
        %1561 = vmatpush.xpose.msra.mxu0 0.0
        %1562 = vmatpush.xpose.msra.mxu0 0.0
        %1563 = vmatpush.xpose.msra.mxu0 0.0
        %1564 = vmatpush.xpose.msra.mxu0 0.0
        %1565 = vmatpush.xpose.msra.mxu0 0.0
        %1566 = vmatpush.xpose.msra.mxu0 0.0
        %1567 = vmatpush.xpose.msra.mxu0 0.0
        %1568 = vmatpush.xpose.msra.mxu0 0.0
        %1569 = vmatpush.xpose.msra.mxu0 0.0
        %1570 = vmatpush.xpose.msra.mxu0 %v1553
        %1571 = vmatmul.f32.gmra.mxu0 %v1551
        %v1572 = vpop.f32.mrf.mxu0
        %v1573 = vadd.f32 0.0, %v1572
        %1574 = vdwg.mxu0
        %v1575 = vsel %vm984, %v1573, -inf
        %1576 = vmax.xlane.f32.xlu0 %v1575
        %v1577 = vpop.xlane.xlu0 %1576
        %v1578 = vsub.f32 %v1573, %v1577
        %v1579 = vmul.f32 %v1578, 1.442695
        %v1580 = vpow.pop %v1579
        %v1581 = vsel %vm984, %v1580, 0.0
        %1582 = vadd.xlane.f32.xlu0 %v1581
        %v1583 = vpop.xlane.xlu0 %1582
        %v1584 = vrcp.pop %v1583
        %v1585 = vmul.f32 %v1580, %v1584
        %1587 = vrot.lane.b32.xlu0 %v1478, 120
        %v1588 = vpop.permute.xlu0 %1587
        %v1591 = vsel %vm984, %v1585, 0
        %1593 = vmatpush.msra.mxu0 0.0
        %1594 = vmatpush.msra.mxu0 0.0
        %1595 = vmatpush.msra.mxu0 0.0
        %1596 = vmatpush.msra.mxu0 0.0
        %1597 = vmatpush.msra.mxu0 0.0
        %1598 = vmatpush.msra.mxu0 0.0
        %1599 = vmatpush.msra.mxu0 0.0
        %1600 = vmatpush.msra.mxu0 0.0
        %1601 = vmatpush.msra.mxu0 0.0
        %1602 = vmatpush.msra.mxu0 0.0
        %1603 = vmatpush.msra.mxu0 0.0
        %1604 = vmatpush.msra.mxu0 0.0
        %1605 = vmatpush.msra.mxu0 0.0
        %1606 = vmatpush.msra.mxu0 0.0
        %1607 = vmatpush.msra.mxu0 0.0
        %1608 = vmatpush.msra.mxu0 %v1588
        %1609 = vmatmul.f32.gmra.mxu0 %v1591
        %v1610 = vpop.f32.mrf.mxu0
        %v1611 = vadd.f32 0.0, %v1610
        %1612 = vdwg.mxu0
        %v1614 = vsel %vm984, %v1611, 0
        %1616 = vmatpush.msra.mxu0 0.0
        %1617 = vmatpush.msra.mxu0 0.0
        %1618 = vmatpush.msra.mxu0 0.0
        %1619 = vmatpush.msra.mxu0 0.0
        %1620 = vmatpush.msra.mxu0 0.0
        %1621 = vmatpush.msra.mxu0 0.0
        %1622 = vmatpush.msra.mxu0 0.0
        %1623 = vmatpush.msra.mxu0 0.0
        %1624 = vmatpush.msra.mxu0 0.0
        %1625 = vmatpush.msra.mxu0 0.0
        %1626 = vmatpush.msra.mxu0 0.0
        %1627 = vmatpush.msra.mxu0 0.0
        %1628 = vmatpush.msra.mxu0 0.0
        %1629 = vmatpush.msra.mxu0 0.0
        %1630 = vmatpush.msra.mxu0 0.0
        %1631 = vmatpush.msra.mxu0 %v1481
        %1632 = vmatmul.f32.gmra.mxu0 %v1614
        %v1633 = vpop.f32.mrf.mxu0
        %v1634 = vadd.f32 0.0, %v1633
        %1635 = vdwg.mxu0
        %v1637 = vsel %vm984, %v1545, 0
        %1639 = vmatpush.msra.mxu0 0.0
        %1640 = vmatpush.msra.mxu0 0.0
        %1641 = vmatpush.msra.mxu0 0.0
        %1642 = vmatpush.msra.mxu0 0.0
        %1643 = vmatpush.msra.mxu0 0.0
        %1644 = vmatpush.msra.mxu0 0.0
        %1645 = vmatpush.msra.mxu0 0.0
        %1646 = vmatpush.msra.mxu0 0.0
        %1647 = vmatpush.msra.mxu0 0.0
        %1648 = vmatpush.msra.mxu0 0.0
        %1649 = vmatpush.msra.mxu0 0.0
        %1650 = vmatpush.msra.mxu0 0.0
        %1651 = vmatpush.msra.mxu0 0.0
        %1652 = vmatpush.msra.mxu0 0.0
        %1653 = vmatpush.msra.mxu0 0.0
        %1654 = vmatpush.msra.mxu0 %v1480
        %1655 = vmatmul.f32.gmra.mxu0 %v1637
        %v1656 = vpop.f32.mrf.mxu0
        %v1657 = vadd.f32 %v1634, %v1656
        %1658 = vdwg.mxu0
        %1659 = vrot.lane.b32.xlu0 %v1484, 112
        %v1660 = vpop.permute.xlu0 %1659
        %1661 = vrot.lane.b32.xlu0 %v1436, 80
        %v1662 = vpop.permute.xlu0 %1661
        %v1663 = vsel %vm984, %v1660, 0
        %v1665 = vsel %vm984, %v1662, 0
        %1667 = vmatpush.xpose.msra.mxu0 0.0
        %1668 = vmatpush.xpose.msra.mxu0 0.0
        %1669 = vmatpush.xpose.msra.mxu0 0.0
        %1670 = vmatpush.xpose.msra.mxu0 0.0
        %1671 = vmatpush.xpose.msra.mxu0 0.0
        %1672 = vmatpush.xpose.msra.mxu0 0.0
        %1673 = vmatpush.xpose.msra.mxu0 0.0
        %1674 = vmatpush.xpose.msra.mxu0 0.0
        %1675 = vmatpush.xpose.msra.mxu0 0.0
        %1676 = vmatpush.xpose.msra.mxu0 0.0
        %1677 = vmatpush.xpose.msra.mxu0 0.0
        %1678 = vmatpush.xpose.msra.mxu0 0.0
        %1679 = vmatpush.xpose.msra.mxu0 0.0
        %1680 = vmatpush.xpose.msra.mxu0 0.0
        %1681 = vmatpush.xpose.msra.mxu0 0.0
        %1682 = vmatpush.xpose.msra.mxu0 %v1665
        %1683 = vmatmul.f32.gmra.mxu0 %v1663
        %v1684 = vpop.f32.mrf.mxu0
        %v1685 = vadd.f32 0.0, %v1684
        %1686 = vdwg.mxu0
        %v1687 = vsel %vm984, %v1685, -inf
        %1688 = vmax.xlane.f32.xlu0 %v1687
        %v1689 = vpop.xlane.xlu0 %1688
        %v1690 = vsub.f32 %v1685, %v1689
        %v1691 = vmul.f32 %v1690, 1.442695
        %v1692 = vpow.pop %v1691
        %v1693 = vsel %vm984, %v1692, 0.0
        %1694 = vadd.xlane.f32.xlu0 %v1693
        %v1695 = vpop.xlane.xlu0 %1694
        %v1696 = vrcp.pop %v1695
        %v1697 = vmul.f32 %v1692, %v1696
        %1698 = vrot.lane.b32.xlu0 %v1478, 112
        %v1699 = vpop.permute.xlu0 %1698
        %v1702 = vsel %vm984, %v1697, 0
        %1704 = vmatpush.msra.mxu0 0.0
        %1705 = vmatpush.msra.mxu0 0.0
        %1706 = vmatpush.msra.mxu0 0.0
        %1707 = vmatpush.msra.mxu0 0.0
        %1708 = vmatpush.msra.mxu0 0.0
        %1709 = vmatpush.msra.mxu0 0.0
        %1710 = vmatpush.msra.mxu0 0.0
        %1711 = vmatpush.msra.mxu0 0.0
        %1712 = vmatpush.msra.mxu0 0.0
        %1713 = vmatpush.msra.mxu0 0.0
        %1714 = vmatpush.msra.mxu0 0.0
        %1715 = vmatpush.msra.mxu0 0.0
        %1716 = vmatpush.msra.mxu0 0.0
        %1717 = vmatpush.msra.mxu0 0.0
        %1718 = vmatpush.msra.mxu0 0.0
        %1719 = vmatpush.msra.mxu0 %v1699
        %1720 = vmatmul.f32.gmra.mxu0 %v1702
        %v1721 = vpop.f32.mrf.mxu0
        %v1722 = vadd.f32 0.0, %v1721
        %1723 = vdwg.mxu0
        %v1725 = vsel %vm984, %v1722, 0
        %1727 = vmatpush.msra.mxu0 0.0
        %1728 = vmatpush.msra.mxu0 0.0
        %1729 = vmatpush.msra.mxu0 0.0
        %1730 = vmatpush.msra.mxu0 0.0
        %1731 = vmatpush.msra.mxu0 0.0
        %1732 = vmatpush.msra.mxu0 0.0
        %1733 = vmatpush.msra.mxu0 0.0
        %1734 = vmatpush.msra.mxu0 0.0
        %1735 = vmatpush.msra.mxu0 0.0
        %1736 = vmatpush.msra.mxu0 0.0
        %1737 = vmatpush.msra.mxu0 0.0
        %1738 = vmatpush.msra.mxu0 0.0
        %1739 = vmatpush.msra.mxu0 0.0
        %1740 = vmatpush.msra.mxu0 0.0
        %1741 = vmatpush.msra.mxu0 0.0
        %1742 = vmatpush.msra.mxu0 %v1482
        %1743 = vmatmul.f32.gmra.mxu0 %v1725
        %v1744 = vpop.f32.mrf.mxu0
        %v1745 = vadd.f32 0.0, %v1744
        %1746 = vdwg.mxu0
        %v1747 = vadd.f32 %v1657, %v1745
        %1748 = vrot.lane.b32.xlu0 %v1484, 104
        %v1749 = vpop.permute.xlu0 %1748
        %1750 = vrot.lane.b32.xlu0 %v1436, 72
        %v1751 = vpop.permute.xlu0 %1750
        %v1752 = vsel %vm984, %v1749, 0
        %v1754 = vsel %vm984, %v1751, 0
        %1756 = vmatpush.xpose.msra.mxu0 0.0
        %1757 = vmatpush.xpose.msra.mxu0 0.0
        %1758 = vmatpush.xpose.msra.mxu0 0.0
        %1759 = vmatpush.xpose.msra.mxu0 0.0
        %1760 = vmatpush.xpose.msra.mxu0 0.0
        %1761 = vmatpush.xpose.msra.mxu0 0.0
        %1762 = vmatpush.xpose.msra.mxu0 0.0
        %1763 = vmatpush.xpose.msra.mxu0 0.0
        %1764 = vmatpush.xpose.msra.mxu0 0.0
        %1765 = vmatpush.xpose.msra.mxu0 0.0
        %1766 = vmatpush.xpose.msra.mxu0 0.0
        %1767 = vmatpush.xpose.msra.mxu0 0.0
        %1768 = vmatpush.xpose.msra.mxu0 0.0
        %1769 = vmatpush.xpose.msra.mxu0 0.0
        %1770 = vmatpush.xpose.msra.mxu0 0.0
        %1771 = vmatpush.xpose.msra.mxu0 %v1754
        %1772 = vmatmul.f32.gmra.mxu0 %v1752
        %v1773 = vpop.f32.mrf.mxu0
        %v1774 = vadd.f32 0.0, %v1773
        %1775 = vdwg.mxu0
        %v1776 = vsel %vm984, %v1774, -inf
        %1777 = vmax.xlane.f32.xlu0 %v1776
        %v1778 = vpop.xlane.xlu0 %1777
        %v1779 = vsub.f32 %v1774, %v1778
        %v1780 = vmul.f32 %v1779, 1.442695
        %v1781 = vpow.pop %v1780
        %v1782 = vsel %vm984, %v1781, 0.0
        %1783 = vadd.xlane.f32.xlu0 %v1782
        %v1784 = vpop.xlane.xlu0 %1783
        %v1785 = vrcp.pop %v1784
        %v1786 = vmul.f32 %v1781, %v1785
        %1787 = vrot.lane.b32.xlu0 %v1478, 104
        %v1788 = vpop.permute.xlu0 %1787
        %v1791 = vsel %vm984, %v1786, 0
        %1793 = vmatpush.msra.mxu0 0.0
        %1794 = vmatpush.msra.mxu0 0.0
        %1795 = vmatpush.msra.mxu0 0.0
        %1796 = vmatpush.msra.mxu0 0.0
        %1797 = vmatpush.msra.mxu0 0.0
        %1798 = vmatpush.msra.mxu0 0.0
        %1799 = vmatpush.msra.mxu0 0.0
        %1800 = vmatpush.msra.mxu0 0.0
        %1801 = vmatpush.msra.mxu0 0.0
        %1802 = vmatpush.msra.mxu0 0.0
        %1803 = vmatpush.msra.mxu0 0.0
        %1804 = vmatpush.msra.mxu0 0.0
        %1805 = vmatpush.msra.mxu0 0.0
        %1806 = vmatpush.msra.mxu0 0.0
        %1807 = vmatpush.msra.mxu0 0.0
        %1808 = vmatpush.msra.mxu0 %v1788
        %1809 = vmatmul.f32.gmra.mxu0 %v1791
        %v1810 = vpop.f32.mrf.mxu0
        %v1811 = vadd.f32 0.0, %v1810
        %1812 = vdwg.mxu0
        %v1814 = vsel %vm984, %v1811, 0
        %1816 = vmatpush.msra.mxu0 0.0
        %1817 = vmatpush.msra.mxu0 0.0
        %1818 = vmatpush.msra.mxu0 0.0
        %1819 = vmatpush.msra.mxu0 0.0
        %1820 = vmatpush.msra.mxu0 0.0
        %1821 = vmatpush.msra.mxu0 0.0
        %1822 = vmatpush.msra.mxu0 0.0
        %1823 = vmatpush.msra.mxu0 0.0
        %1824 = vmatpush.msra.mxu0 0.0
        %1825 = vmatpush.msra.mxu0 0.0
        %1826 = vmatpush.msra.mxu0 0.0
        %1827 = vmatpush.msra.mxu0 0.0
        %1828 = vmatpush.msra.mxu0 0.0
        %1829 = vmatpush.msra.mxu0 0.0
        %1830 = vmatpush.msra.mxu0 0.0
        %1831 = vmatpush.msra.mxu0 %v1483
        %1832 = vmatmul.f32.gmra.mxu0 %v1814
        %v1833 = vpop.f32.mrf.mxu0
        %v1834 = vadd.f32 0.0, %v1833
        %1835 = vdwg.mxu0
        %v1836 = vadd.f32 %v1747, %v1834
        %v1837 = vld [vmem:[%s11] sm:$0x1]
        %v1839 = vperm.slane %v1837, 0
        %v1841 = vadd.f32 %v1836, %v1839
        %v1842 = vld [vmem:[%s18] sm:$0x1]
        %v1843 = vld [vmem:[%s19] sm:$0x1]
        %v1844 = vadd.f32 %v1405, %v1841
        %v1845 = vsel %vm863, %v1844, 0.0
        %1846 = vadd.xlane.f32.xlu0 %v1845
        %v1847 = vpop.xlane.xlu0 %1846
        %v1848 = vmul.f32 %v1847, %v1378
        %v1849 = vsub.f32 %v1844, %v1848
        %v1850 = vmul.f32 %v1849, %v1849
        %v1851 = vsel %vm863, %v1850, 0.0
        %1852 = vadd.xlane.f32.xlu0 %v1851
        %v1853 = vpop.xlane.xlu0 %1852
        %v1854 = vmul.f32 %v1853, %v1378
        %v1855 = vadd.f32 %v1854, 1e-05
        %v1856 = vrsqrt.pop %v1855
        %v1857 = vmul.f32 %v1856, %v1855
        %v1858 = vmul.f32 %v1857, %v1856
        %v1859 = vmul.f32 0.5, %v1858
        %v1860 = vsub.f32 1.5, %v1859
        %v1861 = vmul.f32 %v1856, %v1860
        %vm1862 = vweird.f32 %v1855
        %vm1863 = vweird.f32 %v1856
        %vm1864 = vmor %vm1862, %vm1863
        %v1865 = vsel %vm1864, %v1856, %v1861
        %v1866 = vmul.f32 %v1849, %v1865
        %v1868 = vperm.slane %v1842, 0
        %v1870 = vmul.f32 %v1866, %v1868
        %v1872 = vperm.slane %v1843, 0
        %v1874 = vadd.f32 %v1870, %v1872
        %v1875 = vld [vmem:[#allocation11] sm:$0xff]
        %v1876 = vld [vmem:[#allocation11 + $0x8] sm:$0xff]
        %v1877 = vld [vmem:[#allocation11 + $0x10] sm:$0xff]
        %v1878 = vld [vmem:[#allocation11 + $0x18] sm:$0xff]
        %v1879 = vld [vmem:[%s13] sm:$0x1]
        %v1881 = vperm.slane %v1879, 0
        %v1884 = vsel %vm863, %v1874, 0
        %1886 = vmatpush.msra.mxu0 0.0
        %1887 = vmatpush.msra.mxu0 0.0
        %1888 = vmatpush.msra.mxu0 0.0
        %1889 = vmatpush.msra.mxu0 0.0
        %1890 = vmatpush.msra.mxu0 0.0
        %1891 = vmatpush.msra.mxu0 0.0
        %1892 = vmatpush.msra.mxu0 0.0
        %1893 = vmatpush.msra.mxu0 0.0
        %1894 = vmatpush.msra.mxu0 0.0
        %1895 = vmatpush.msra.mxu0 0.0
        %1896 = vmatpush.msra.mxu0 0.0
        %1897 = vmatpush.msra.mxu0 0.0
        %1898 = vmatpush.msra.mxu0 %v1878
        %1899 = vmatpush.msra.mxu0 %v1877
        %1900 = vmatpush.msra.mxu0 %v1876
        %1901 = vmatpush.msra.mxu0 %v1875
        %1902 = vmatmul.f32.gmra.mxu0 %v1884
        %v1903 = vpop.f32.mrf.mxu0
        %v1904 = vadd.f32 %v1881, %v1903
        %1905 = vdwg.mxu0
        %v1906 = vmax.f32 %v1904, 0.0
        %v1907 = vld [vmem:[%s14] sm:$0xff]
        %v1908 = vld [vmem:[%s14 + $0x8] sm:$0xff]
        %v1909 = vld [vmem:[%s14 + $0x10] sm:$0xff]
        %v1910 = vld [vmem:[%s14 + $0x18] sm:$0xff]
        %v1911 = vld [vmem:[%s14 + $0x20] sm:$0xff]
        %v1912 = vld [vmem:[%s14 + $0x28] sm:$0xff]
        %v1913 = vld [vmem:[%s14 + $0x30] sm:$0xff]
        %v1914 = vld [vmem:[%s14 + $0x38] sm:$0xff]
        %v1915 = vld [vmem:[%s15] sm:$0x1]
        %v1917 = vperm.slane %v1915, 0
        %vm1919 = vcmask 523264
        %v1921 = vsel %vm1919, %v1906, 0
        %1923 = vmatpush.msra.mxu0 0.0
        %1924 = vmatpush.msra.mxu0 0.0
        %1925 = vmatpush.msra.mxu0 0.0
        %1926 = vmatpush.msra.mxu0 0.0
        %1927 = vmatpush.msra.mxu0 0.0
        %1928 = vmatpush.msra.mxu0 0.0
        %1929 = vmatpush.msra.mxu0 0.0
        %1930 = vmatpush.msra.mxu0 0.0
        %1931 = vmatpush.msra.mxu0 %v1914
        %1932 = vmatpush.msra.mxu0 %v1913
        %1933 = vmatpush.msra.mxu0 %v1912
        %1934 = vmatpush.msra.mxu0 %v1911
        %1935 = vmatpush.msra.mxu0 %v1910
        %1936 = vmatpush.msra.mxu0 %v1909
        %1937 = vmatpush.msra.mxu0 %v1908
        %1938 = vmatpush.msra.mxu0 %v1907
        %1939 = vmatmul.f32.gmra.mxu0 %v1921
        %v1940 = vpop.f32.mrf.mxu0
        %v1941 = vadd.f32 %v1917, %v1940
        %1942 = vdwg.mxu0
        %v1943 = vld [vmem:[%s20] sm:$0x1]
        %v1944 = vld [vmem:[%s21] sm:$0x1]
        %v1945 = vadd.f32 %v1874, %v1941
        %v1946 = vsel %vm863, %v1945, 0.0
        %1947 = vadd.xlane.f32.xlu0 %v1946
        %v1948 = vpop.xlane.xlu0 %1947
        %v1949 = vmul.f32 %v1948, %v1378
        %v1950 = vsub.f32 %v1945, %v1949
        %v1951 = vmul.f32 %v1950, %v1950
        %v1952 = vsel %vm863, %v1951, 0.0
        %1953 = vadd.xlane.f32.xlu0 %v1952
        %v1954 = vpop.xlane.xlu0 %1953
        %v1955 = vmul.f32 %v1954, %v1378
        %v1956 = vadd.f32 %v1955, 1e-05
        %v1957 = vrsqrt.pop %v1956
        %v1958 = vmul.f32 %v1957, %v1956
        %v1959 = vmul.f32 %v1958, %v1957
        %v1960 = vmul.f32 0.5, %v1959
        %v1961 = vsub.f32 1.5, %v1960
        %v1962 = vmul.f32 %v1957, %v1961
        %vm1963 = vweird.f32 %v1956
        %vm1964 = vweird.f32 %v1957
        %vm1965 = vmor %vm1963, %vm1964
        %v1966 = vsel %vm1965, %v1957, %v1962
        %v1967 = vmul.f32 %v1950, %v1966
        %v1969 = vperm.slane %v1943, 0
        %v1971 = vmul.f32 %v1967, %v1969
        %v1973 = vperm.slane %v1944, 0
        %v1975 = vadd.f32 %v1971, %v1973
        %1976 = vst.msk [vmem:[%s835] sm:$0xff] %vm863, %v1975
        %s1977 = sand.u32 %s534, 1
        %s1978 = scalar_lea.sflag [#allocation4], %s1977
        %s1979 = sand.u32 %s534, 1
        %s1980 = smul.addr %s1979, 8
        %s1981 = scalar_lea.vmem [#allocation13], %s1980
        // Predicated region
        $region133: #{tpu_custom_call.1} parent=107 // pred_check
          %p1982 = pneg %p544
        $region134: #{tpu_custom_call.1} parent=107 // pred_check_branch
          %1984 = sbr.rel (%p1982) target = $region136
        $region135: #{tpu_custom_call.1} parent=107 // pred_region
          %1986 = vsyncadd %s1978, 0
          %s1987 = smul.addr %s44, 8
          %s1988 = scalar_lea.hbm %s22, %s1987
          %s1990 = sshll.u32 %s1981, 4
          %s1991 = int_to_ptr.vmem [resolvable:$true] %s1990
          %s1992 = sshll.u32 %s1988, 4
          %s1993 = int_to_ptr.hbm [resolvable:$true] %s1992
          %1995 = dma.vmem_to_hbm [thread:$0]  %s1991, 128, %s1993, %s1978
        $region136: #{tpu_custom_call.1} parent=107 // pred_fallthru
          _
      $region108: #{tpu_custom_call.1} parent=5 // pred_fallthru
        _
      %p1996 = scmp.le.s32.totalorder 2, %s39
      // Predicated region
      $region137: #{tpu_custom_call.1} parent=5 // pred_check
        %p1997 = pneg %p1996
      $region138: #{tpu_custom_call.1} parent=5 // pred_check_branch
        %1999 = sbr.rel (%p1997) target = $region140
      $region139: #{tpu_custom_call.1} parent=5 // pred_region
        %s2000 = ssub.s32 %s39, 2
        // Predicated region
        $region141: #{tpu_custom_call.1} parent=139 // pred_check
          %p2001 = pneg %p550
        $region142: #{tpu_custom_call.1} parent=139 // pred_check_branch
          %2003 = sbr.rel (%p2001) target = $region144
        $region143: #{tpu_custom_call.1} parent=139 // pred_region
          %s2004 = sand.u32 %s535, 1
          %s2005 = scalar_lea.sflag [#allocation4], %s2004
          %s2006 = sand.u32 %s535, 1
          %s2007 = smul.addr %s2006, 8
          %s2008 = scalar_lea.vmem [#allocation13], %s2007
          %2010 = dma.done %s2005, 128
        $region144: #{tpu_custom_call.1} parent=139 // pred_fallthru
          _
      $region140: #{tpu_custom_call.1} parent=5 // pred_fallthru
        _
    $region6: #{tpu_custom_call.1} parent=1 // loop_footer
      %s43 = sadd.s32 1, %s39
    $region7: #{tpu_custom_call.1} parent=1 // loop_footer_branch
      %38 = sbr.rel target = $region3
    $region8: #{tpu_custom_call.1} parent=1 // loop_exit
      _
    %2011 = vsyncpa [#allocation3], 1
    %s2012 = scalar_lea.sflag [#allocation3], 1
    %2013 = vsyncpa %s2012, 1
    %2014 = vsyncpa [#allocation6], 1
    %s2015 = scalar_lea.sflag [#allocation6], 1
    %2016 = vsyncpa %s2015, 1
    %2017 = vsyncpa [#allocation9], 1
    %2018 = vsyncpa [#allocation12], 1
    %2019 = vsyncpa [#allocation4], 1
    %s2020 = scalar_lea.sflag [#allocation4], 1
    %2021 = vsyncpa %s2020, 1

</llo_original>
